<compile_context>
chip_gen: v6e
topology: v6e:2x2x1
jax: 0.10.0
libtpu: 0.0.40
codegen_flags: <defaults>
</compile_context>

<pallas_src>
import math

import jax
import jax.numpy as jnp
from jax import lax
from jax.experimental import pallas as pl
from jax.experimental.pallas import tpu as pltpu


_VMEM = pl.BlockSpec(memory_space=pltpu.MemorySpace.VMEM)
_BN_EPS = 1e-5


# ---------------------------------------------------------------------------
# In-kernel helpers (pure register/VMEM values; no scratch round-trips)
# ---------------------------------------------------------------------------

def _bn_train_halves(y, gamma, beta):
    """BatchNorm1d with training-mode (biased) batch statistics, computed
    separately for the first / second half of the rows (x vs x_aug branch).
    Rows are regrouped as (2, half, ...) — half is a multiple of 8, so the
    split is a tile-aligned relabel — avoiding any cross-sublane concat of
    the normalized halves.  Reductions are done one axis at a time
    (mean of means == mean for full equal-size axes)."""
    shp = y.shape
    half = shp[0] // 2
    y2 = y.reshape((2, half) + shp[1:])
    axes = tuple(range(1, y2.ndim - 1))          # every axis but (branch, C)
    m = y2
    for ax in axes:
        m = jnp.mean(m, axis=ax, keepdims=True)
    cen = y2 - m
    var = jnp.square(cen)
    for ax in axes:
        var = jnp.mean(var, axis=ax, keepdims=True)
    yn = (cen * lax.rsqrt(var + _BN_EPS)).reshape(shp)
    return yn * gamma + beta


def _projector_pair_tail(z, gamma, beta, w2i, b2i, w2c, b2c, zi_out, zc_out):
    """Tail of the fused (instance || cluster) projector pair.
    z: (2B, 512) pre-BN output of the fused first Linear."""
    z = _bn_train_halves(z, gamma, beta)
    z = jnp.maximum(z, 0.0)
    h1 = w2i.shape[0]                                   # 256
    yi = jnp.dot(z[:, :h1], w2i, preferred_element_type=jnp.float32) + b2i
    yc = jnp.dot(z[:, h1:], w2c, preferred_element_type=jnp.float32) + b2c
    # instance head: F.normalize(dim=1); eps=1e-12 folded into the rsqrt clamp
    ssq = jnp.sum(jnp.square(yi), axis=1, keepdims=True)
    zi_out[...] = yi * lax.rsqrt(jnp.maximum(ssq, 1e-24))
    # cluster head: Softmax(dim=1); reciprocal runs on the EUP, not the VALU
    mx = jnp.max(yc, axis=1, keepdims=True)
    e = jnp.exp(yc - mx)
    zc_out[...] = e * pl.reciprocal(jnp.sum(e, axis=1, keepdims=True),
                                    approx=False)


def _conv1d(x, w, K, pad):
    """Conv1d(stride=1, bias=False), channels-last, computed entirely on
    register values (zero-padding built by concatenation).
      Cin == 1 : K tap-FMAs on the VPU (contraction length 1).
      Cin >= 8 : im2col patches -> ONE 2-D GEMM.  The output length is padded
                 up to a multiple of 8 so (N, Lp, K*Cin) <-> (N*Lp, K*Cin)
                 reshapes are pure tile relabels; extra rows are sliced off."""
    N, L, Cin = x.shape
    Cout = w.shape[1]
    Lout = L + 2 * pad - K + 1
    lp = ((Lout + 7) // 8) * 8
    tail = lp + K - 1 - (pad + L)                # >= pad; covers right zero pad
    xp = jnp.concatenate(
        [jnp.zeros((N, pad, Cin), x.dtype), x,
         jnp.zeros((N, tail, Cin), x.dtype)], axis=1)
    if Cin == 1:
        # TODO(synk): a lane-dense (2B, L) layout with pltpu.roll taps would
        # avoid the (.., 1)-lane broadcast, but shapes here are tiny.
        acc = jnp.zeros((N, Lout, Cout), jnp.float32)
        for k in range(K):
            acc = acc + xp[:, k:k + Lout, :] * w[k:k + 1, :]
        return acc
    patches = jnp.concatenate([xp[:, k:k + lp, :] for k in range(K)], axis=2)
    y = jnp.dot(patches.reshape(N * lp, K * Cin), w,
                preferred_element_type=jnp.float32)
    return y.reshape(N, lp, Cout)[:, :Lout, :]


def _maxpool1d_k2s2p1(y):
    """nn.MaxPool1d(kernel_size=2, stride=2, padding=1) along axis 1, built
    from register values only (no scratch, no masked stores).  y is post-ReLU
    (non-negative), so torch's -inf edge padding can never win and the edge
    windows reduce to their single valid element."""
    N, L, C = y.shape
    n_mid = (L - 1) // 2
    rows = [y[:, 0:1, :]]                                     # window [pad, y0]
    for i in range(1, n_mid + 1):
        rows.append(jnp.maximum(y[:, 2 * i - 1:2 * i, :],
                                y[:, 2 * i:2 * i + 1, :]))
    if L % 2 == 0:
        rows.append(y[:, L - 1:L, :])                         # window [y_{L-1}, pad]
    return jnp.concatenate(rows, axis=1)                      # (N, L//2 + 1, C)


# ---------------------------------------------------------------------------
# Fused kernels
# ---------------------------------------------------------------------------

def make_time_mode_kernel(num_layers, hidden):
    """Fused 't' path: bidirectional multi-layer LSTM (seq_len == 1) + head
    Linear + fused (instance || cluster) projector pair; x / x_aug batched."""
    H = hidden

    def kernel(*refs):
        x_ref, h0_ref, c0_ref = refs[:3]
        rest = refs[3:]
        lstm = [rest[2 * l:2 * l + 2] for l in range(num_layers)]
        (head_w, head_b, w1, b1, gamma, beta, w2i, b2i, w2c, b2c,
         h_out, zi_out, zc_out) = rest[2 * num_layers:]

        inp = x_ref[...]                                  # (2B, in_size)
        for l, (wcat, b) in enumerate(lstm):
            h = h0_ref[l]                                 # (2B, 2H) = [fwd|bwd]
            c = c0_ref[l]
            # single fused gate GEMM: concat([x, h]) @ [W_ih; W_hh]  (lane-dense 8H=128)
            g = jnp.dot(jnp.concatenate([inp, h], axis=1), wcat[...],
                        preferred_element_type=jnp.float32) + b[...]
            i_g = jax.nn.sigmoid(g[:, 0:2 * H])
            f_g = jax.nn.sigmoid(g[:, 2 * H:4 * H])
            g_g = jnp.tanh(g[:, 4 * H:6 * H])
            o_g = jax.nn.sigmoid(g[:, 6 * H:8 * H])
            c = f_g * c + i_g * g_g
            inp = o_g * jnp.tanh(c)                       # bidirectional output
        # nn.Dropout -> identity (eval semantics)
        hx = (jnp.dot(inp, head_w[...], preferred_element_type=jnp.float32)
              + head_b[...])                              # (2B, output_size)
        h_out[...] = hx
        z = jnp.dot(hx, w1[...], preferred_element_type=jnp.float32) + b1[...]
        _projector_pair_tail(z, gamma[...], beta[...], w2i[...], b2i[...],
                             w2c[...], b2c[...], zi_out, zc_out)

    return kernel


def make_freq_mode_kernel(conv_cfg):
    """Fused 'f' path: 3x (Conv1d + BatchNorm1d + ReLU + MaxPool1d) + fused
    (instance || cluster) projector pair; x / x_aug batched along rows.
    conv_cfg: tuple of (kernel_size, padding) per conv block."""
    n_conv = len(conv_cfg)

    def kernel(*refs):
        x_ref = refs[0]
        conv_refs = [refs[1 + 3 * i:4 + 3 * i] for i in range(n_conv)]
        p0 = 1 + 3 * n_conv
        w1, b1, gamma, beta, w2i, b2i, w2c, b2c = refs[p0:p0 + 8]
        y_out, zi_out, zc_out = refs[p0 + 8:p0 + 11]

        x = x_ref[...]                                    # (2B, L, Cin), NLC
        for (w, g_bn, b_bn), (K, pad) in zip(conv_refs, conv_cfg):
            y = _conv1d(x, w[...], K, pad)
            y = _bn_train_halves(y, g_bn[...], b_bn[...])
            y = jnp.maximum(y, 0.0)
            x = _maxpool1d_k2s2p1(y)
        y_out[...] = x                                    # single store (2B, L_f, C_f)

        # Flatten fused into the projectors' first Linear as ONE GEMM on the
        # in-register value.  Lane concat gives feature order l*C_f + c; W1
        # rows were reordered at init to match (torch NCW flatten is c*L_f+l).
        L_f = x.shape[1]
        xflat = jnp.concatenate([x[:, l, :] for l in range(L_f)], axis=1)
        z = jnp.dot(xflat, w1[...], preferred_element_type=jnp.float32) + b1[...]
        _projector_pair_tail(z, gamma[...], beta[...], w2i[...], b2i[...],
                             w2c[...], b2c[...], zi_out, zc_out)

    return kernel


# ---------------------------------------------------------------------------
# Wrappers (one pallas_call per mode; whole-array VMEM blocks, no grid —
# train-mode BatchNorm couples all rows of a branch, so a batch grid would
# break the fused statistics, and the shapes are tiny anyway)
# ---------------------------------------------------------------------------

def _conv_plan(cfg, series_len):
    specs = [(cfg['kernel_size'], cfg['kernel_size'] // 2,
              cfg['input_channels'], 16),
             (8, 4, 16, 32),
             (8, 4, 32, cfg['final_out_channels'])]
    plan, L = [], series_len
    for K, pad, cin, cout in specs:
        lout = L + 2 * pad - K + 1       # conv, stride 1
        lpool = lout // 2 + 1            # MaxPool1d(2, 2, padding=1)
        plan.append(dict(K=K, pad=pad, cin=cin, cout=cout,
                         lout=lout, lpool=lpool))
        L = lpool
    return plan, L


def time_forward(params, cfg, x, x_aug, key):
    B = x.shape[0]
    assert x.shape[1] == 1, "CDCC's reshape requires LSTM seq_len == 1"
    H, nl = cfg['hidden_size'], cfg['num_layers']
    xcat = jnp.concatenate([x[:, 0, :], x_aug[:, 0, :]], axis=0)   # (2B, In)
    k1, k2 = jax.random.split(key)
    # TODO(synk): torch.randn initial states use torch RNG, not reproducible.
    h0 = jax.random.normal(k1, (nl, 2 * B, 2 * H), jnp.float32)
    c0 = jax.random.normal(k2, (nl, 2 * B, 2 * H), jnp.float32)

    args = [xcat, h0, c0]
    for lp in params['lstm']:
        args += [lp['wcat'], lp['b']]
    pt = params['proj_t']
    args += [params['head']['w_t'], params['head']['b'],
             pt['w1'], pt['b1'], pt['gamma'], pt['beta'],
             pt['w2i'], pt['b2i'], pt['w2c'], pt['b2c']]

    h, zi, zc = pl.pallas_call(
        make_time_mode_kernel(nl, H),
        out_shape=(
            jax.ShapeDtypeStruct((2 * B, cfg['output_size']), jnp.float32),
            jax.ShapeDtypeStruct((2 * B, 128), jnp.float32),
            jax.ShapeDtypeStruct((2 * B, cfg['class_num']), jnp.float32)),
        in_specs=[_VMEM] * len(args),
        out_specs=(_VMEM, _VMEM, _VMEM),
    )(*args)
    return h, zi, zc


def freq_forward(params, cfg, x, x_aug):
    assert cfg['stride'] == 1, "kernel implements stride == 1 only"
    B = x.shape[0]
    xcat = jnp.transpose(jnp.concatenate([x, x_aug], axis=0), (0, 2, 1))  # NLC
    plan, L_f = _conv_plan(cfg, x.shape[2])
    C_f = cfg['final_out_channels']

    args = [xcat]
    for name in ('conv1', 'conv2', 'conv3'):
        cp = params[name]
        args += [cp['w'], cp['gamma'], cp['beta']]
    pf = params['proj_f']
    args += [pf['w1r'], pf['b1'], pf['gamma'], pf['beta'],
             pf['w2i'], pf['b2i'], pf['w2c'], pf['b2c']]

    conv_cfg = tuple((blk['K'], blk['pad']) for blk in plan)

    y, zi, zc = pl.pallas_call(
        make_freq_mode_kernel(conv_cfg),
        out_shape=(
            jax.ShapeDtypeStruct((2 * B, L_f, C_f), jnp.float32),
            jax.ShapeDtypeStruct((2 * B, 128), jnp.float32),
            jax.ShapeDtypeStruct((2 * B, cfg['class_num']), jnp.float32)),
        in_specs=[_VMEM] * len(args),
        out_specs=(_VMEM, _VMEM, _VMEM),
    )(*args)
    # torch: h = x.reshape(B, -1) on the NCW tensor  (tiny XLA layout op)
    h = jnp.transpose(y, (0, 2, 1)).reshape(2 * B, C_f * L_f)
    return h, zi, zc


def cdcc_forward(params, cfg, x_in, x_in_aug, mode='t',
                 key=jax.random.PRNGKey(123)):
    B = x_in.shape[0]
    if mode == 't':
        h, zi, zc = time_forward(params, cfg, x_in, x_in_aug, key)
    elif mode == 'f':
        h, zi, zc = freq_forward(params, cfg, x_in, x_in_aug)
    else:
        raise ValueError(mode)
    # Dropout1 / Dropout2 -> identity (eval semantics)
    return h[:B], zi[:B], zc[:B], h[B:], zi[B:], zc[B:]


# ---------------------------------------------------------------------------
# Deterministic parameter init (shapes follow the torch module's __init__,
# pre-packed into the fused-kernel layouts)
# ---------------------------------------------------------------------------

def _uinit(key, shape, fan_in):
    bound = 1.0 / math.sqrt(max(fan_in, 1))
    return jax.random.uniform(key, shape, jnp.float32, -bound, bound)


def init_params(key, cfg, series_len):
    H, nl = cfg['hidden_size'], cfg['num_layers']
    keys = iter(jax.random.split(key, 128))
    nxt = lambda: next(keys)

    # Bidirectional LSTM; per layer the fwd/bwd gate weights and W_ih / W_hh
    # are stacked into ONE (in_sz + 2H, 8H) GEMM operand.  Gate column order:
    # [i_f,i_b | f_f,f_b | g_f,g_b | o_f,o_b].  W_hh is block-diagonal so the
    # two directions stay independent (exactly like torch bidirectional LSTM).
    lstm = []
    for l in range(nl):
        in_sz = cfg['input_size'] if l == 0 else 2 * H
        wih = _uinit(nxt(), (in_sz, 8 * H), H)
        whh_f = _uinit(nxt(), (H, 4 * H), H)
        whh_b = _uinit(nxt(), (H, 4 * H), H)
        zero = jnp.zeros((H, H), jnp.float32)
        top, bot = [], []
        for gidx in range(4):
            top += [whh_f[:, gidx * H:(gidx + 1) * H], zero]
            bot += [zero, whh_b[:, gidx * H:(gidx + 1) * H]]
        whh = jnp.concatenate([jnp.concatenate(top, axis=1),
                               jnp.concatenate(bot, axis=1)], axis=0)
        wcat = jnp.concatenate([wih, whh], axis=0)        # (in_sz + 2H, 8H)
        b = _uinit(nxt(), (1, 8 * H), H)
        lstm.append(dict(wcat=wcat, b=b))

    head = dict(w_t=_uinit(nxt(), (2 * H, cfg['output_size']), 2 * H),
                b=_uinit(nxt(), (1, cfg['output_size']), 2 * H))

    plan, L_f = _conv_plan(cfg, series_len)
    convs = {}
    for name, blk in zip(('conv1', 'conv2', 'conv3'), plan):
        K, cin, cout = blk['K'], blk['cin'], blk['cout']
        # im2col row order: feature = k*Cin + cin
        convs[name] = dict(w=_uinit(nxt(), (K * cin, cout), cin * K),
                           gamma=jnp.ones((1, 1, cout), jnp.float32),
                           beta=jnp.zeros((1, 1, cout), jnp.float32))

    def proj_pair(in_dim, class_num):
        # instance + cluster projectors: first Linear / BN params concatenated
        # feature-wise (256 || 256 = 512) into one lane-dense GEMM.
        return dict(
            w1=jnp.concatenate([_uinit(nxt(), (in_dim, 256), in_dim),
                                _uinit(nxt(), (in_dim, 256), in_dim)], axis=1),
            b1=jnp.concatenate([_uinit(nxt(), (1, 256), in_dim),
                                _uinit(nxt(), (1, 256), in_dim)], axis=1),
            gamma=jnp.ones((1, 512), jnp.float32),
            beta=jnp.zeros((1, 512), jnp.float32),
            w2i=_uinit(nxt(), (256, 128), 256),
            b2i=_uinit(nxt(), (1, 128), 256),
            w2c=_uinit(nxt(), (256, class_num), 256),
            b2c=_uinit(nxt(), (1, class_num), 256),
        )

    proj_t = proj_pair(cfg['output_size'], cfg['class_num'])

    C_f = cfg['final_out_channels']
    assert C_f * L_f == cfg['CNNoutput_channel'], \
        "CNNoutput_channel must equal final_out_channels * final_length"
    proj_f = proj_pair(cfg['CNNoutput_channel'], cfg['class_num'])
    # Reorder W1 rows (torch NCW flatten: feature = c*L_f + l) to l-major
    # order (l*C_f + c) so the kernel's lane-concat flatten feeds one GEMM.
    w1 = proj_f.pop('w1')
    proj_f['w1r'] = jnp.transpose(w1.reshape(C_f, L_f, 512),
                                  (1, 0, 2)).reshape(L_f * C_f, 512)

    return dict(lstm=lstm, head=head, proj_t=proj_t, proj_f=proj_f, **convs)


# ---------------------------------------------------------------------------
# Demo
# ---------------------------------------------------------------------------

if __name__ == "__main__":
    B = 8
    L = 16  # time-series length
    cfg = dict(
        input_size=L,          # LSTM feature size (seq_len == 1)
        hidden_size=16,
        num_layers=2,
        output_size=32,
        dropout_rate=0.1,
        input_channels=1,
        kernel_size=8,
        stride=1,              # kernel implements stride = 1
        dropout=0.35,
        final_out_channels=8,
        class_num=4,
        CNNoutput_channel=32,  # final_out_channels * final_length
    )

    key = jax.random.PRNGKey(0)
    k1, k2, k3, k4, kp = jax.random.split(key, 5)
    x_t = jax.random.normal(k1, (B, 1, cfg['input_size']), jnp.float32)
    x_t_aug = jax.random.normal(k2, (B, 1, cfg['input_size']), jnp.float32)
    x_f = jax.random.normal(k3, (B, cfg['input_channels'], L), jnp.float32)
    x_f_aug = jax.random.normal(k4, (B, cfg['input_channels'], L), jnp.float32)

    params = init_params(kp, cfg, series_len=L)

    fwd_t = jax.jit(lambda p, a, b: cdcc_forward(p, cfg, a, b, mode='t'))
    fwd_f = jax.jit(lambda p, a, b: cdcc_forward(p, cfg, a, b, mode='f'))

    out_t = fwd_t(params, x_t, x_t_aug)
    out_f = fwd_f(params, x_f, x_f_aug)
    jax.block_until_ready((out_t, out_f))

    # shape / sanity checks
    assert out_t[0].shape == (B, cfg['output_size'])
    assert out_t[1].shape == (B, 128) and out_t[2].shape == (B, cfg['class_num'])
    assert out_t[3].shape == (B, cfg['output_size'])
    assert out_f[0].shape == (B, cfg['CNNoutput_channel'])
    assert out_f[1].shape == (B, 128) and out_f[2].shape == (B, cfg['class_num'])
    assert jnp.allclose(jnp.sum(out_t[2], axis=1), 1.0, atol=1e-4)
    assert jnp.allclose(jnp.sum(out_f[2], axis=1), 1.0, atol=1e-4)
    assert bool(jnp.all(jnp.isfinite(out_t[1]))) and bool(jnp.all(jnp.isfinite(out_f[1])))

    print("KERNEL_OK")
</pallas_src>

<mosaic_0001>
module attributes {stable_mosaic.version = 11 : i64} {
  func.func @kernel(%arg0: memref<16x16xf32, #tpu.memory_space<vmem>>, %arg1: memref<2x16x32xf32, #tpu.memory_space<vmem>>, %arg2: memref<2x16x32xf32, #tpu.memory_space<vmem>>, %arg3: memref<48x128xf32, #tpu.memory_space<vmem>>, %arg4: memref<1x128xf32, #tpu.memory_space<vmem>>, %arg5: memref<64x128xf32, #tpu.memory_space<vmem>>, %arg6: memref<1x128xf32, #tpu.memory_space<vmem>>, %arg7: memref<32x32xf32, #tpu.memory_space<vmem>>, %arg8: memref<1x32xf32, #tpu.memory_space<vmem>>, %arg9: memref<32x512xf32, #tpu.memory_space<vmem>>, %arg10: memref<1x512xf32, #tpu.memory_space<vmem>>, %arg11: memref<1x512xf32, #tpu.memory_space<vmem>>, %arg12: memref<1x512xf32, #tpu.memory_space<vmem>>, %arg13: memref<256x128xf32, #tpu.memory_space<vmem>>, %arg14: memref<1x128xf32, #tpu.memory_space<vmem>>, %arg15: memref<256x4xf32, #tpu.memory_space<vmem>>, %arg16: memref<1x4xf32, #tpu.memory_space<vmem>>, %arg17: memref<16x32xf32, #tpu.memory_space<vmem>>, %arg18: memref<16x128xf32, #tpu.memory_space<vmem>>, %arg19: memref<16x4xf32, #tpu.memory_space<vmem>>) attributes {dimension_semantics = [], scalar_prefetch = 0 : i64, scratch_operands = 0 : i64, tpu.core_type = #tpu.core_type<tc>} {
    %c0 = arith.constant 0 : index
    %c0_0 = arith.constant 0 : index
    %0 = vector.load %arg0[%c0, %c0_0] : memref<16x16xf32, #tpu.memory_space<vmem>>, vector<16x16xf32>
    %c0_1 = arith.constant 0 : index
    %c0_2 = arith.constant 0 : index
    %c0_3 = arith.constant 0 : index
    %1 = vector.load %arg1[%c0_1, %c0_2, %c0_3] : memref<2x16x32xf32, #tpu.memory_space<vmem>>, vector<1x16x32xf32>
    %2 = vector.shape_cast %1 : vector<1x16x32xf32> to vector<16x32xf32>
    %c0_4 = arith.constant 0 : index
    %c0_5 = arith.constant 0 : index
    %c0_6 = arith.constant 0 : index
    %3 = vector.load %arg2[%c0_4, %c0_5, %c0_6] : memref<2x16x32xf32, #tpu.memory_space<vmem>>, vector<1x16x32xf32>
    %4 = vector.shape_cast %3 : vector<1x16x32xf32> to vector<16x32xf32>
    %5 = tpu.concatenate %0, %2 in 1 : vector<16x16xf32>, vector<16x32xf32> -> vector<16x48xf32>
    %c0_7 = arith.constant 0 : index
    %c0_8 = arith.constant 0 : index
    %6 = vector.load %arg3[%c0_7, %c0_8] : memref<48x128xf32, #tpu.memory_space<vmem>>, vector<48x128xf32>
    %cst = arith.constant dense<0.000000e+00> : vector<16x128xf32>
    %7 = tpu.matmul %5, %6, %cst {dimension_numbers = #tpu.dot_dimension_numbers<[1], [0], [0], [1], [0, 0, 1, 1], [], []>} : vector<16x48xf32>, vector<48x128xf32>, vector<16x128xf32> -> vector<16x128xf32>
    %c0_9 = arith.constant 0 : index
    %c0_10 = arith.constant 0 : index
    %8 = vector.load %arg4[%c0_9, %c0_10] : memref<1x128xf32, #tpu.memory_space<vmem>>, vector<1x128xf32>
    %9 = vector.broadcast %8 : vector<1x128xf32> to vector<16x128xf32>
    %10 = arith.addf %7, %9 : vector<16x128xf32>
    %11 = vector.extract_strided_slice %10 {offsets = [0, 0], sizes = [16, 32], strides = [1, 1]} : vector<16x128xf32> to vector<16x32xf32>
    %12 = arith.negf %11 : vector<16x32xf32>
    %13 = math.exp %12 : vector<16x32xf32>
    %cst_11 = arith.constant 1.000000e+00 : f32
    %14 = vector.broadcast %cst_11 : f32 to vector<16x32xf32>
    %15 = arith.addf %14, %13 : vector<16x32xf32>
    %16 = arith.divf %14, %15 : vector<16x32xf32>
    %17 = vector.extract_strided_slice %10 {offsets = [0, 32], sizes = [16, 32], strides = [1, 1]} : vector<16x128xf32> to vector<16x32xf32>
    %18 = arith.negf %17 : vector<16x32xf32>
    %19 = math.exp %18 : vector<16x32xf32>
    %cst_12 = arith.constant 1.000000e+00 : f32
    %20 = vector.broadcast %cst_12 : f32 to vector<16x32xf32>
    %21 = arith.addf %20, %19 : vector<16x32xf32>
    %22 = arith.divf %20, %21 : vector<16x32xf32>
    %23 = vector.extract_strided_slice %10 {offsets = [0, 64], sizes = [16, 32], strides = [1, 1]} : vector<16x128xf32> to vector<16x32xf32>
    %24 = math.tanh %23 : vector<16x32xf32>
    %25 = vector.extract_strided_slice %10 {offsets = [0, 96], sizes = [16, 32], strides = [1, 1]} : vector<16x128xf32> to vector<16x32xf32>
    %26 = arith.negf %25 : vector<16x32xf32>
    %27 = math.exp %26 : vector<16x32xf32>
    %cst_13 = arith.constant 1.000000e+00 : f32
    %28 = vector.broadcast %cst_13 : f32 to vector<16x32xf32>
    %29 = arith.addf %28, %27 : vector<16x32xf32>
    %30 = arith.divf %28, %29 : vector<16x32xf32>
    %31 = arith.mulf %22, %4 : vector<16x32xf32>
    %32 = arith.mulf %16, %24 : vector<16x32xf32>
    %33 = arith.addf %31, %32 : vector<16x32xf32>
    %34 = math.tanh %33 : vector<16x32xf32>
    %35 = arith.mulf %30, %34 : vector<16x32xf32>
    %c1 = arith.constant 1 : index
    %c0_14 = arith.constant 0 : index
    %c0_15 = arith.constant 0 : index
    %36 = vector.load %arg1[%c1, %c0_14, %c0_15] : memref<2x16x32xf32, #tpu.memory_space<vmem>>, vector<1x16x32xf32>
    %37 = vector.shape_cast %36 : vector<1x16x32xf32> to vector<16x32xf32>
    %c1_16 = arith.constant 1 : index
    %c0_17 = arith.constant 0 : index
    %c0_18 = arith.constant 0 : index
    %38 = vector.load %arg2[%c1_16, %c0_17, %c0_18] : memref<2x16x32xf32, #tpu.memory_space<vmem>>, vector<1x16x32xf32>
    %39 = vector.shape_cast %38 : vector<1x16x32xf32> to vector<16x32xf32>
    %40 = tpu.concatenate %35, %37 in 1 : vector<16x32xf32>, vector<16x32xf32> -> vector<16x64xf32>
    %c0_19 = arith.constant 0 : index
    %c0_20 = arith.constant 0 : index
    %41 = vector.load %arg5[%c0_19, %c0_20] : memref<64x128xf32, #tpu.memory_space<vmem>>, vector<64x128xf32>
    %cst_21 = arith.constant dense<0.000000e+00> : vector<16x128xf32>
    %42 = tpu.matmul %40, %41, %cst_21 {dimension_numbers = #tpu.dot_dimension_numbers<[1], [0], [0], [1], [0, 0, 1, 1], [], []>} : vector<16x64xf32>, vector<64x128xf32>, vector<16x128xf32> -> vector<16x128xf32>
    %c0_22 = arith.constant 0 : index
    %c0_23 = arith.constant 0 : index
    %43 = vector.load %arg6[%c0_22, %c0_23] : memref<1x128xf32, #tpu.memory_space<vmem>>, vector<1x128xf32>
    %44 = vector.broadcast %43 : vector<1x128xf32> to vector<16x128xf32>
    %45 = arith.addf %42, %44 : vector<16x128xf32>
    %46 = vector.extract_strided_slice %45 {offsets = [0, 0], sizes = [16, 32], strides = [1, 1]} : vector<16x128xf32> to vector<16x32xf32>
    %47 = arith.negf %46 : vector<16x32xf32>
    %48 = math.exp %47 : vector<16x32xf32>
    %cst_24 = arith.constant 1.000000e+00 : f32
    %49 = vector.broadcast %cst_24 : f32 to vector<16x32xf32>
    %50 = arith.addf %49, %48 : vector<16x32xf32>
    %51 = arith.divf %49, %50 : vector<16x32xf32>
    %52 = vector.extract_strided_slice %45 {offsets = [0, 32], sizes = [16, 32], strides = [1, 1]} : vector<16x128xf32> to vector<16x32xf32>
    %53 = arith.negf %52 : vector<16x32xf32>
    %54 = math.exp %53 : vector<16x32xf32>
    %cst_25 = arith.constant 1.000000e+00 : f32
    %55 = vector.broadcast %cst_25 : f32 to vector<16x32xf32>
    %56 = arith.addf %55, %54 : vector<16x32xf32>
    %57 = arith.divf %55, %56 : vector<16x32xf32>
    %58 = vector.extract_strided_slice %45 {offsets = [0, 64], sizes = [16, 32], strides = [1, 1]} : vector<16x128xf32> to vector<16x32xf32>
    %59 = math.tanh %58 : vector<16x32xf32>
    %60 = vector.extract_strided_slice %45 {offsets = [0, 96], sizes = [16, 32], strides = [1, 1]} : vector<16x128xf32> to vector<16x32xf32>
    %61 = arith.negf %60 : vector<16x32xf32>
    %62 = math.exp %61 : vector<16x32xf32>
    %cst_26 = arith.constant 1.000000e+00 : f32
    %63 = vector.broadcast %cst_26 : f32 to vector<16x32xf32>
    %64 = arith.addf %63, %62 : vector<16x32xf32>
    %65 = arith.divf %63, %64 : vector<16x32xf32>
    %66 = arith.mulf %57, %39 : vector<16x32xf32>
    %67 = arith.mulf %51, %59 : vector<16x32xf32>
    %68 = arith.addf %66, %67 : vector<16x32xf32>
    %69 = math.tanh %68 : vector<16x32xf32>
    %70 = arith.mulf %65, %69 : vector<16x32xf32>
    %c0_27 = arith.constant 0 : index
    %c0_28 = arith.constant 0 : index
    %71 = vector.load %arg7[%c0_27, %c0_28] : memref<32x32xf32, #tpu.memory_space<vmem>>, vector<32x32xf32>
    %cst_29 = arith.constant dense<0.000000e+00> : vector<16x32xf32>
    %72 = tpu.matmul %70, %71, %cst_29 {dimension_numbers = #tpu.dot_dimension_numbers<[1], [0], [0], [1], [0, 0, 1, 1], [], []>} : vector<16x32xf32>, vector<32x32xf32>, vector<16x32xf32> -> vector<16x32xf32>
    %c0_30 = arith.constant 0 : index
    %c0_31 = arith.constant 0 : index
    %73 = vector.load %arg8[%c0_30, %c0_31] : memref<1x32xf32, #tpu.memory_space<vmem>>, vector<1x32xf32>
    %74 = vector.broadcast %73 : vector<1x32xf32> to vector<16x32xf32>
    %75 = arith.addf %72, %74 : vector<16x32xf32>
    %c0_32 = arith.constant 0 : index
    %c0_33 = arith.constant 0 : index
    %76 = vector.load %arg17[%c0_32, %c0_33] : memref<16x32xf32, #tpu.memory_space<vmem>>, vector<16x32xf32>
    tpu.vector_store %arg17[%c0_32, %c0_33], %75 {strides = array<i32>} : memref<16x32xf32, #tpu.memory_space<vmem>>, vector<16x32xf32>,
    %c0_34 = arith.constant 0 : index
    %c0_35 = arith.constant 0 : index
    %77 = vector.load %arg9[%c0_34, %c0_35] : memref<32x512xf32, #tpu.memory_space<vmem>>, vector<32x512xf32>
    %cst_36 = arith.constant dense<0.000000e+00> : vector<16x512xf32>
    %78 = tpu.matmul %75, %77, %cst_36 {dimension_numbers = #tpu.dot_dimension_numbers<[1], [0], [0], [1], [0, 0, 1, 1], [], []>} : vector<16x32xf32>, vector<32x512xf32>, vector<16x512xf32> -> vector<16x512xf32>
    %c0_37 = arith.constant 0 : index
    %c0_38 = arith.constant 0 : index
    %79 = vector.load %arg10[%c0_37, %c0_38] : memref<1x512xf32, #tpu.memory_space<vmem>>, vector<1x512xf32>
    %80 = vector.broadcast %79 : vector<1x512xf32> to vector<16x512xf32>
    %81 = arith.addf %78, %80 : vector<16x512xf32>
    %c0_39 = arith.constant 0 : index
    %c0_40 = arith.constant 0 : index
    %82 = vector.load %arg11[%c0_39, %c0_40] : memref<1x512xf32, #tpu.memory_space<vmem>>, vector<1x512xf32>
    %c0_41 = arith.constant 0 : index
    %c0_42 = arith.constant 0 : index
    %83 = vector.load %arg12[%c0_41, %c0_42] : memref<1x512xf32, #tpu.memory_space<vmem>>, vector<1x512xf32>
    %c0_43 = arith.constant 0 : index
    %c0_44 = arith.constant 0 : index
    %84 = vector.load %arg13[%c0_43, %c0_44] : memref<256x128xf32, #tpu.memory_space<vmem>>, vector<256x128xf32>
    %c0_45 = arith.constant 0 : index
    %c0_46 = arith.constant 0 : index
    %85 = vector.load %arg14[%c0_45, %c0_46] : memref<1x128xf32, #tpu.memory_space<vmem>>, vector<1x128xf32>
    %c0_47 = arith.constant 0 : index
    %c0_48 = arith.constant 0 : index
    %86 = vector.load %arg15[%c0_47, %c0_48] : memref<256x4xf32, #tpu.memory_space<vmem>>, vector<256x4xf32>
    %c0_49 = arith.constant 0 : index
    %c0_50 = arith.constant 0 : index
    %87 = vector.load %arg16[%c0_49, %c0_50] : memref<1x4xf32, #tpu.memory_space<vmem>>, vector<1x4xf32>
    %88 = vector.shape_cast %81 : vector<16x512xf32> to vector<2x8x512xf32>
    %cst_51 = arith.constant dense<0.000000e+00> : vector<2x512xf32>
    %89 = vector.multi_reduction <add>, %88, %cst_51 [1] : vector<2x8x512xf32> to vector<2x512xf32>
    %90 = vector.shape_cast %89 : vector<2x512xf32> to vector<2x1x512xf32>
    %cst_52 = arith.constant 8.000000e+00 : f32
    %91 = vector.broadcast %cst_52 : f32 to vector<2x1x512xf32>
    %92 = arith.divf %90, %91 : vector<2x1x512xf32>
    %93 = vector.broadcast %92 : vector<2x1x512xf32> to vector<2x8x512xf32>
    %94 = arith.subf %88, %93 : vector<2x8x512xf32>
    %95 = arith.mulf %94, %94 : vector<2x8x512xf32>
    %cst_53 = arith.constant dense<0.000000e+00> : vector<2x512xf32>
    %96 = vector.multi_reduction <add>, %95, %cst_53 [1] : vector<2x8x512xf32> to vector<2x512xf32>
    %97 = vector.shape_cast %96 : vector<2x512xf32> to vector<2x1x512xf32>
    %cst_54 = arith.constant 8.000000e+00 : f32
    %98 = vector.broadcast %cst_54 : f32 to vector<2x1x512xf32>
    %99 = arith.divf %97, %98 : vector<2x1x512xf32>
    %cst_55 = arith.constant 9.99999974E-6 : f32
    %100 = vector.broadcast %cst_55 : f32 to vector<2x1x512xf32>
    %101 = arith.addf %99, %100 : vector<2x1x512xf32>
    %102 = math.rsqrt %101 : vector<2x1x512xf32>
    %103 = vector.broadcast %102 : vector<2x1x512xf32> to vector<2x8x512xf32>
    %104 = arith.mulf %94, %103 : vector<2x8x512xf32>
    %105 = vector.shape_cast %104 : vector<2x8x512xf32> to vector<16x512xf32>
    %106 = vector.broadcast %82 : vector<1x512xf32> to vector<16x512xf32>
    %107 = arith.mulf %105, %106 : vector<16x512xf32>
    %108 = vector.broadcast %83 : vector<1x512xf32> to vector<16x512xf32>
    %109 = arith.addf %107, %108 : vector<16x512xf32>
    %cst_56 = arith.constant 0.000000e+00 : f32
    %110 = vector.broadcast %cst_56 : f32 to vector<16x512xf32>
    %111 = arith.maximumf %109, %110 : vector<16x512xf32>
    %112 = vector.extract_strided_slice %111 {offsets = [0, 0], sizes = [16, 256], strides = [1, 1]} : vector<16x512xf32> to vector<16x256xf32>
    %cst_57 = arith.constant dense<0.000000e+00> : vector<16x128xf32>
    %113 = tpu.matmul %112, %84, %cst_57 {dimension_numbers = #tpu.dot_dimension_numbers<[1], [0], [0], [1], [0, 0, 1, 1], [], []>} : vector<16x256xf32>, vector<256x128xf32>, vector<16x128xf32> -> vector<16x128xf32>
    %114 = vector.broadcast %85 : vector<1x128xf32> to vector<16x128xf32>
    %115 = arith.addf %113, %114 : vector<16x128xf32>
    %116 = vector.extract_strided_slice %111 {offsets = [0, 256], sizes = [16, 256], strides = [1, 1]} : vector<16x512xf32> to vector<16x256xf32>
    %cst_58 = arith.constant dense<0.000000e+00> : vector<16x4xf32>
    %117 = tpu.matmul %116, %86, %cst_58 {dimension_numbers = #tpu.dot_dimension_numbers<[1], [0], [0], [1], [0, 0, 1, 1], [], []>} : vector<16x256xf32>, vector<256x4xf32>, vector<16x4xf32> -> vector<16x4xf32>
    %118 = vector.broadcast %87 : vector<1x4xf32> to vector<16x4xf32>
    %119 = arith.addf %117, %118 : vector<16x4xf32>
    %120 = arith.mulf %115, %115 : vector<16x128xf32>
    %cst_59 = arith.constant dense<0.000000e+00> : vector<16xf32>
    %121 = vector.multi_reduction <add>, %120, %cst_59 [1] : vector<16x128xf32> to vector<16xf32>
    %122 = vector.shape_cast %121 : vector<16xf32> to vector<16x1xf32>
    %cst_60 = arith.constant 1.000000e-24 : f32
    %123 = vector.broadcast %cst_60 : f32 to vector<16x1xf32>
    %124 = arith.maximumf %122, %123 : vector<16x1xf32>
    %125 = math.rsqrt %124 : vector<16x1xf32>
    %126 = vector.broadcast %125 : vector<16x1xf32> to vector<16x128xf32>
    %127 = arith.mulf %115, %126 : vector<16x128xf32>
    %c0_61 = arith.constant 0 : index
    %c0_62 = arith.constant 0 : index
    %128 = vector.load %arg18[%c0_61, %c0_62] : memref<16x128xf32, #tpu.memory_space<vmem>>, vector<16x128xf32>
    tpu.vector_store %arg18[%c0_61, %c0_62], %127 {strides = array<i32>} : memref<16x128xf32, #tpu.memory_space<vmem>>, vector<16x128xf32>,
    %cst_63 = arith.constant dense<0xFF800000> : vector<16xf32>
    %129 = vector.multi_reduction <maximumf>, %119, %cst_63 [1] : vector<16x4xf32> to vector<16xf32>
    %130 = vector.shape_cast %129 : vector<16xf32> to vector<16x1xf32>
    %131 = vector.broadcast %130 : vector<16x1xf32> to vector<16x4xf32>
    %132 = arith.subf %119, %131 : vector<16x4xf32>
    %133 = math.exp %132 : vector<16x4xf32>
    %cst_64 = arith.constant dense<0.000000e+00> : vector<16xf32>
    %134 = vector.multi_reduction <add>, %133, %cst_64 [1] : vector<16x4xf32> to vector<16xf32>
    %135 = vector.shape_cast %134 : vector<16xf32> to vector<16x1xf32>
    %136 = tpu.reciprocal %135 : vector<16x1xf32> -> vector<16x1xf32>
    %137 = vector.broadcast %136 : vector<16x1xf32> to vector<16x4xf32>
    %138 = arith.mulf %133, %137 : vector<16x4xf32>
    %c0_65 = arith.constant 0 : index
    %c0_66 = arith.constant 0 : index
    %139 = vector.load %arg19[%c0_65, %c0_66] : memref<16x4xf32, #tpu.memory_space<vmem>>, vector<16x4xf32>
    tpu.vector_store %arg19[%c0_65, %c0_66], %138 {strides = array<i32>} : memref<16x4xf32, #tpu.memory_space<vmem>>, vector<16x4xf32>,
    return
  }
}

</mosaic_0001>

<llo_original>
// kernel: _lambda_.1
$region0: #{_lambda_.1}
  #allocation0 [shape = 'u32[]', space=smem, size = 0x4, offset = 0x4, fixed_abs, tag = 'smem constant byte address 0x4 - core index']
  #allocation1 [shape = 'u32[144,128]{1,0:T(1,128)}', space=vmem, size = 0x12000, scoped, tag = 'internal scratch']
  %s0 = inlined_call_operand.vmem [shape: f32[16,16], index: 0, kind: input, shape index: {}]
  %s1 = inlined_call_operand.vmem [shape: f32[2,16,32], index: 1, kind: input, shape index: {}]
  %s2 = inlined_call_operand.vmem [shape: f32[2,16,32], index: 2, kind: input, shape index: {}]
  %s3 = inlined_call_operand.hbm [shape: f32[48,128], index: 3, kind: input, shape index: {}]
  %s4 = inlined_call_operand.vmem [shape: f32[1,128], index: 4, kind: input, shape index: {}]
  %s5 = inlined_call_operand.vmem [shape: f32[64,128], index: 5, kind: input, shape index: {}]
  %s6 = inlined_call_operand.vmem [shape: f32[1,128], index: 6, kind: input, shape index: {}]
  %s7 = inlined_call_operand.vmem [shape: f32[32,32], index: 7, kind: input, shape index: {}]
  %s8 = inlined_call_operand.hbm [shape: f32[1,32], index: 8, kind: input, shape index: {}]
  %s9 = inlined_call_operand.vmem [shape: f32[32,512], index: 9, kind: input, shape index: {}]
  %s10 = inlined_call_operand.hbm [shape: f32[1,512], index: 10, kind: input, shape index: {}]
  %s11 = inlined_call_operand.hbm [shape: f32[1,512], index: 11, kind: input, shape index: {}]
  %s12 = inlined_call_operand.hbm [shape: f32[1,512], index: 12, kind: input, shape index: {}]
  %s13 = inlined_call_operand.vmem [shape: f32[256,128], index: 13, kind: input, shape index: {}]
  %s14 = inlined_call_operand.hbm [shape: f32[1,128], index: 14, kind: input, shape index: {}]
  %s15 = inlined_call_operand.vmem [shape: f32[256,4], index: 15, kind: input, shape index: {}]
  %s16 = inlined_call_operand.vmem [shape: f32[1,4], index: 16, kind: input, shape index: {}]
  %s17 = inlined_call_operand.vmem [shape: f32[16,32], index: 17, kind: output, shape index: {0}]
  %s18 = inlined_call_operand.vmem [shape: f32[16,128], index: 18, kind: output, shape index: {1}]
  %s19 = inlined_call_operand.vmem [shape: f32[16,4], index: 19, kind: output, shape index: {2}]
  %20 = xla_tuple %s17, %s18, %s19
  %s21 = sld [smem:[#allocation0]]
  $region118: #{_lambda_.1} parent=0
    _
  %s23 = ssub.s32 1, %s21
  %s24 = scalar_select 0, %s23, %s21
  $region1: #{_lambda_.1} parent=0
    #allocation2 [shape = 'u8[24576]{0}', space=vmem, size = 0x6000, scoped, tag = 'input window, operand 3, single buffered']
    #allocation3 [shape = 's32[1]{0}', space=sflag, size = 0x4, scoped, tag = 'scoped memory for _lambda_.1']
    #allocation4 [shape = 'u8[512]{0}', space=vmem, size = 0x400, scoped, tag = 'input window, operand 8, single buffered']
    #allocation5 [shape = 's32[1]{0}', space=sflag, size = 0x4, scoped, tag = 'scoped memory for _lambda_.1']
    #allocation6 [shape = 'u8[2048]{0}', space=vmem, size = 0x800, scoped, tag = 'input window, operand 10, single buffered']
    #allocation7 [shape = 'u8[2048]{0}', space=vmem, size = 0x800, scoped, tag = 'input window, operand 11, single buffered']
    #allocation8 [shape = 's32[1]{0}', space=sflag, size = 0x4, scoped, tag = 'scoped memory for _lambda_.1']
    #allocation9 [shape = 'u8[2048]{0}', space=vmem, size = 0x800, scoped, tag = 'input window, operand 12, single buffered']
    #allocation10 [shape = 'u8[512]{0}', space=vmem, size = 0x400, scoped, tag = 'input window, operand 14, single buffered']
    #allocation11 [shape = 's32[1]{0}', space=sflag, size = 0x4, scoped, tag = 'scoped memory for _lambda_.1']
    %25 = vsyncpa [#allocation3], 0
    %26 = vsyncpa [#allocation5], 0
    %27 = vsyncpa [#allocation8], 0
    %28 = vsyncpa [#allocation11], 0
    // Predicated region
    $region2: #{_lambda_.1} parent=1 // pred_check
      _
    $region3: #{_lambda_.1} parent=1 // pred_check_branch
      %30 = sbr.rel (0) target = $region5
    $region4: #{_lambda_.1} parent=1 // pred_region
      _
    $region5: #{_lambda_.1} parent=1 // pred_fallthru
      _
    // Predicated region
    $region6: #{_lambda_.1} parent=1 // pred_check
      _
    $region7: #{_lambda_.1} parent=1 // pred_check_branch
      %32 = sbr.rel (0) target = $region9
    $region8: #{_lambda_.1} parent=1 // pred_region
      _
    $region9: #{_lambda_.1} parent=1 // pred_fallthru
      _
    // Predicated region
    $region10: #{_lambda_.1} parent=1 // pred_check
      _
    $region11: #{_lambda_.1} parent=1 // pred_check_branch
      %34 = sbr.rel (0) target = $region13
    $region12: #{_lambda_.1} parent=1 // pred_region
      _
    $region13: #{_lambda_.1} parent=1 // pred_fallthru
      _
    // Predicated region
    $region14: #{_lambda_.1} parent=1 // pred_check
      _
    $region15: #{_lambda_.1} parent=1 // pred_check_branch
      %36 = sbr.rel (0) target = $region17
    $region16: #{_lambda_.1} parent=1 // pred_region
      %s38 = ssub.s32 768, 768
      %39 = vsyncadd [#allocation3], %s38
      %s40 = sshll.u32 [#allocation2], 4
      %s41 = int_to_ptr.vmem [resolvable:$true] %s40
      %46 = dma.hbm_to_vmem [thread:$0]  %s3, 768, %s41, [#allocation3], 128, 128, 8
    $region17: #{_lambda_.1} parent=1 // pred_fallthru
      _
    // Predicated region
    $region18: #{_lambda_.1} parent=1 // pred_check
      _
    $region19: #{_lambda_.1} parent=1 // pred_check_branch
      %48 = sbr.rel (0) target = $region21
    $region20: #{_lambda_.1} parent=1 // pred_region
      _
    $region21: #{_lambda_.1} parent=1 // pred_fallthru
      _
    // Predicated region
    $region22: #{_lambda_.1} parent=1 // pred_check
      _
    $region23: #{_lambda_.1} parent=1 // pred_check_branch
      %50 = sbr.rel (0) target = $region25
    $region24: #{_lambda_.1} parent=1 // pred_region
      _
    $region25: #{_lambda_.1} parent=1 // pred_fallthru
      _
    // Predicated region
    $region26: #{_lambda_.1} parent=1 // pred_check
      _
    $region27: #{_lambda_.1} parent=1 // pred_check_branch
      %52 = sbr.rel (0) target = $region29
    $region28: #{_lambda_.1} parent=1 // pred_region
      _
    $region29: #{_lambda_.1} parent=1 // pred_fallthru
      _
    // Predicated region
    $region30: #{_lambda_.1} parent=1 // pred_check
      _
    $region31: #{_lambda_.1} parent=1 // pred_check_branch
      %54 = sbr.rel (0) target = $region33
    $region32: #{_lambda_.1} parent=1 // pred_region
      _
    $region33: #{_lambda_.1} parent=1 // pred_fallthru
      _
    // Predicated region
    $region34: #{_lambda_.1} parent=1 // pred_check
      _
    $region35: #{_lambda_.1} parent=1 // pred_check_branch
      %56 = sbr.rel (0) target = $region37
    $region36: #{_lambda_.1} parent=1 // pred_region
      %s58 = ssub.s32 16, 16
      %59 = vsyncadd [#allocation5], %s58
      %s61 = sshll.u32 [#allocation4], 4
      %s62 = int_to_ptr.vmem [resolvable:$true] %s61
      %64 = dma.hbm_to_vmem [thread:$0]  %s8, 16, %s62, [#allocation5]
    $region37: #{_lambda_.1} parent=1 // pred_fallthru
      _
    // Predicated region
    $region38: #{_lambda_.1} parent=1 // pred_check
      _
    $region39: #{_lambda_.1} parent=1 // pred_check_branch
      %66 = sbr.rel (0) target = $region41
    $region40: #{_lambda_.1} parent=1 // pred_region
      _
    $region41: #{_lambda_.1} parent=1 // pred_fallthru
      _
    // Predicated region
    $region42: #{_lambda_.1} parent=1 // pred_check
      _
    $region43: #{_lambda_.1} parent=1 // pred_check_branch
      %68 = sbr.rel (0) target = $region45
    $region44: #{_lambda_.1} parent=1 // pred_region
      %s70 = ssub.s32 64, 64
      %71 = vsyncadd [#allocation5], %s70
      %s73 = sshll.u32 [#allocation6], 4
      %s74 = int_to_ptr.vmem [resolvable:$true] %s73
      %76 = dma.hbm_to_vmem [thread:$0]  %s10, 64, %s74, [#allocation5]
    $region45: #{_lambda_.1} parent=1 // pred_fallthru
      _
    // Predicated region
    $region46: #{_lambda_.1} parent=1 // pred_check
      _
    $region47: #{_lambda_.1} parent=1 // pred_check_branch
      %78 = sbr.rel (0) target = $region49
    $region48: #{_lambda_.1} parent=1 // pred_region
      %s80 = ssub.s32 64, 64
      %81 = vsyncadd [#allocation8], %s80
      %s83 = sshll.u32 [#allocation7], 4
      %s84 = int_to_ptr.vmem [resolvable:$true] %s83
      %86 = dma.hbm_to_vmem [thread:$0]  %s11, 64, %s84, [#allocation8]
    $region49: #{_lambda_.1} parent=1 // pred_fallthru
      _
    // Predicated region
    $region50: #{_lambda_.1} parent=1 // pred_check
      _
    $region51: #{_lambda_.1} parent=1 // pred_check_branch
      %88 = sbr.rel (0) target = $region53
    $region52: #{_lambda_.1} parent=1 // pred_region
      %s90 = ssub.s32 64, 64
      %91 = vsyncadd [#allocation8], %s90
      %s93 = sshll.u32 [#allocation9], 4
      %s94 = int_to_ptr.vmem [resolvable:$true] %s93
      %96 = dma.hbm_to_vmem [thread:$0]  %s12, 64, %s94, [#allocation8]
    $region53: #{_lambda_.1} parent=1 // pred_fallthru
      _
    // Predicated region
    $region54: #{_lambda_.1} parent=1 // pred_check
      _
    $region55: #{_lambda_.1} parent=1 // pred_check_branch
      %98 = sbr.rel (0) target = $region57
    $region56: #{_lambda_.1} parent=1 // pred_region
      _
    $region57: #{_lambda_.1} parent=1 // pred_fallthru
      _
    // Predicated region
    $region58: #{_lambda_.1} parent=1 // pred_check
      _
    $region59: #{_lambda_.1} parent=1 // pred_check_branch
      %100 = sbr.rel (0) target = $region61
    $region60: #{_lambda_.1} parent=1 // pred_region
      %s102 = ssub.s32 16, 16
      %103 = vsyncadd [#allocation11], %s102
      %s105 = sshll.u32 [#allocation10], 4
      %s106 = int_to_ptr.vmem [resolvable:$true] %s105
      %108 = dma.hbm_to_vmem [thread:$0]  %s14, 16, %s106, [#allocation11]
    $region61: #{_lambda_.1} parent=1 // pred_fallthru
      _
    // Predicated region
    $region62: #{_lambda_.1} parent=1 // pred_check
      _
    $region63: #{_lambda_.1} parent=1 // pred_check_branch
      %110 = sbr.rel (0) target = $region65
    $region64: #{_lambda_.1} parent=1 // pred_region
      _
    $region65: #{_lambda_.1} parent=1 // pred_fallthru
      _
    // Predicated region
    $region66: #{_lambda_.1} parent=1 // pred_check
      _
    $region67: #{_lambda_.1} parent=1 // pred_check_branch
      %112 = sbr.rel (0) target = $region69
    $region68: #{_lambda_.1} parent=1 // pred_region
      _
    $region69: #{_lambda_.1} parent=1 // pred_fallthru
      _
    // Predicated region
    $region70: #{_lambda_.1} parent=1 // pred_check
      _
    $region71: #{_lambda_.1} parent=1 // pred_check_branch
      %114 = sbr.rel (0) target = $region73
    $region72: #{_lambda_.1} parent=1 // pred_region
      %115 = dma.done [#allocation3], 768
    $region73: #{_lambda_.1} parent=1 // pred_fallthru
      _
    // Predicated region
    $region74: #{_lambda_.1} parent=1 // pred_check
      _
    $region75: #{_lambda_.1} parent=1 // pred_check_branch
      %117 = sbr.rel (0) target = $region77
    $region76: #{_lambda_.1} parent=1 // pred_region
      %118 = dma.done [#allocation5], 16
    $region77: #{_lambda_.1} parent=1 // pred_fallthru
      _
    // Predicated region
    $region78: #{_lambda_.1} parent=1 // pred_check
      _
    $region79: #{_lambda_.1} parent=1 // pred_check_branch
      %120 = sbr.rel (0) target = $region81
    $region80: #{_lambda_.1} parent=1 // pred_region
      %121 = dma.done [#allocation5], 64
    $region81: #{_lambda_.1} parent=1 // pred_fallthru
      _
    // Predicated region
    $region82: #{_lambda_.1} parent=1 // pred_check
      _
    $region83: #{_lambda_.1} parent=1 // pred_check_branch
      %123 = sbr.rel (0) target = $region85
    $region84: #{_lambda_.1} parent=1 // pred_region
      %124 = dma.done [#allocation8], 64
    $region85: #{_lambda_.1} parent=1 // pred_fallthru
      _
    // Predicated region
    $region86: #{_lambda_.1} parent=1 // pred_check
      _
    $region87: #{_lambda_.1} parent=1 // pred_check_branch
      %126 = sbr.rel (0) target = $region89
    $region88: #{_lambda_.1} parent=1 // pred_region
      %127 = dma.done [#allocation8], 64
    $region89: #{_lambda_.1} parent=1 // pred_fallthru
      _
    // Predicated region
    $region90: #{_lambda_.1} parent=1 // pred_check
      _
    $region91: #{_lambda_.1} parent=1 // pred_check_branch
      %129 = sbr.rel (0) target = $region93
    $region92: #{_lambda_.1} parent=1 // pred_region
      %130 = dma.done [#allocation11], 16
    $region93: #{_lambda_.1} parent=1 // pred_fallthru
      _
    %v131 = vld [vmem:[%s0] sm:$0xff]
    %v132 = vld [vmem:[%s0 + $0x8] sm:$0xff]
    %v133 = vld [vmem:[%s1] sm:$0xff]
    %v134 = vld [vmem:[%s1 + $0x8] sm:$0xff]
    %v135 = vld [vmem:[%s2] sm:$0xff]
    %v136 = vld [vmem:[%s2 + $0x8] sm:$0xff]
    %139 = vrot.lane.b32.xlu0 %v133, 16
    %v140 = vpop.permute.xlu0 %139
    %141 = vrot.lane.b32.xlu0 %v134, 16
    %v142 = vpop.permute.xlu0 %141
    %vm145 = vcmask 130048
    %v146 = vsel %vm145, %v131, %v140
    %v147 = vsel %vm145, %v132, %v142
    %v148 = vld [vmem:[#allocation2] sm:$0xff]
    %v149 = vld [vmem:[#allocation2 + $0x8] sm:$0xff]
    %v150 = vld [vmem:[#allocation2 + $0x10] sm:$0xff]
    %v151 = vld [vmem:[#allocation2 + $0x18] sm:$0xff]
    %v152 = vld [vmem:[#allocation2 + $0x20] sm:$0xff]
    %v153 = vld [vmem:[#allocation2 + $0x28] sm:$0xff]
    %v154 = vld [vmem:[%s4] sm:$0x1]
    %v156 = vlaneseq
    %v157 = vshrl.u32 %v156, 7
    %v158 = vsub.s32 0, %v157
    %v159 = vrot.slane %v154, %v158
    %vm161 = vcmask 392192
    %v163 = vsel %vm161, %v146, 0
    %v166 = vsel %vm161, %v147, 0
    %168 = vmatprep.subr.mxu0 0.0
    %169 = vmatpush1.msra.mxu0 0.0
    %170 = vmatprep.subr.mxu0 0.0
    %171 = vmatpush1.msra.mxu0 0.0
    %172 = vmatprep.subr.mxu0 0.0
    %173 = vmatpush1.msra.mxu0 0.0
    %174 = vmatprep.subr.mxu0 0.0
    %175 = vmatpush1.msra.mxu0 0.0
    %176 = vmatprep.subr.mxu0 0.0
    %177 = vmatpush1.msra.mxu0 0.0
    %178 = vmatprep.subr.mxu0 0.0
    %179 = vmatpush1.msra.mxu0 0.0
    %180 = vmatprep.subr.mxu0 0.0
    %181 = vmatpush1.msra.mxu0 0.0
    %182 = vmatprep.subr.mxu0 0.0
    %183 = vmatpush1.msra.mxu0 0.0
    %184 = vmatprep.subr.mxu0 0.0
    %185 = vmatpush1.msra.mxu0 0.0
    %186 = vmatprep.subr.mxu0 0.0
    %187 = vmatpush1.msra.mxu0 0.0
    %188 = vmatprep.subr.mxu0 0.0
    %189 = vmatpush1.msra.mxu0 %v153
    %190 = vmatprep.subr.mxu0 0.0
    %191 = vmatpush1.msra.mxu0 %v152
    %192 = vmatprep.subr.mxu0 0.0
    %193 = vmatpush1.msra.mxu0 %v151
    %194 = vmatprep.subr.mxu0 0.0
    %195 = vmatpush1.msra.mxu0 %v150
    %196 = vmatprep.subr.mxu0 0.0
    %197 = vmatpush1.msra.mxu0 %v149
    %198 = vmatprep.subr.mxu0 0.0
    %199 = vmatpush1.msra.mxu0 %v148
    %200 = vmatprep.subr.mxu0 0.0
    %201 = vmatpush2.msra.mxu0 0.0
    %202 = vmatprep.subr.mxu0 0.0
    %203 = vmatpush2.msra.mxu0 0.0
    %204 = vmatprep.subr.mxu0 0.0
    %205 = vmatpush2.msra.mxu0 0.0
    %206 = vmatprep.subr.mxu0 0.0
    %207 = vmatpush2.msra.mxu0 0.0
    %208 = vmatprep.subr.mxu0 0.0
    %209 = vmatpush2.msra.mxu0 0.0
    %210 = vmatprep.subr.mxu0 0.0
    %211 = vmatpush2.msra.mxu0 0.0
    %212 = vmatprep.subr.mxu0 0.0
    %213 = vmatpush2.msra.mxu0 0.0
    %214 = vmatprep.subr.mxu0 0.0
    %215 = vmatpush2.msra.mxu0 0.0
    %216 = vmatprep.subr.mxu0 0.0
    %217 = vmatpush2.msra.mxu0 0.0
    %218 = vmatprep.subr.mxu0 0.0
    %219 = vmatpush2.msra.mxu0 0.0
    %220 = vmatprep.subr.mxu0 0.0
    %221 = vmatpush2.msra.mxu0 0.0
    %222 = vmatprep.subr.mxu0 0.0
    %223 = vmatpush2.msra.mxu0 0.0
    %224 = vmatprep.subr.mxu0 0.0
    %225 = vmatpush2.msra.mxu0 0.0
    %226 = vmatprep.subr.mxu0 0.0
    %227 = vmatpush2.msra.mxu0 0.0
    %228 = vmatprep.subr.mxu0 0.0
    %229 = vmatpush2.msra.mxu0 0.0
    %230 = vmatprep.subr.mxu0 0.0
    %231 = vmatpush2.msra.mxu0 0.0
    %232 = vmatprep.mubr.f32.mxu0 0.0
    %233 = vmatmul.mubr.f32.gmra.mxu0 %v163
    %v234 = vpop.f32.mrf.mxu0
    %v235 = vadd.f32 %v159, %v234
    %v236 = vpop.f32.mrf.mxu0
    %237 = vmatprep.mubr.f32.mxu0 0.0
    %238 = vmatmul.mubr.f32.gmra.mxu0 %v166
    %v239 = vpop.f32.mrf.mxu0
    %v240 = vadd.f32 %v159, %v239
    %v241 = vpop.f32.mrf.mxu0
    %242 = vdwg.mxu0
    %v243 = vxor.u32 %v235, 2147483648
    %v244 = vxor.u32 %v240, 2147483648
    %v245 = vmul.f32 %v243, 1.442695
    %v246 = vpow.pop %v245
    %v247 = vmul.f32 %v244, 1.442695
    %v248 = vpow.pop %v247
    %v249 = vadd.f32 %v246, 1.0
    %v250 = vadd.f32 %v248, 1.0
    %v251 = vrcp.pop %v249
    %v252 = vmul.f32 1.0, %v251
    %v253 = vrcp.pop %v250
    %v254 = vmul.f32 1.0, %v253
    %v255 = vtanh.pop %v235
    %v256 = vtanh.pop %v240
    %259 = vrot.lane.b32.xlu0 %v135, 32
    %v260 = vpop.permute.xlu0 %259
    %261 = vrot.lane.b32.xlu0 %v136, 32
    %v262 = vpop.permute.xlu0 %261
    %v265 = vmul.f32 %v252, %v260
    %v266 = vmul.f32 %v254, %v262
    %269 = vrot.lane.b32.xlu0 %v255, 64
    %v270 = vpop.permute.xlu0 %269
    %271 = vrot.lane.b32.xlu0 %v256, 64
    %v272 = vpop.permute.xlu0 %271
    %v275 = vmul.f32 %v252, %v270
    %v276 = vmul.f32 %v254, %v272
    %279 = vrot.lane.b32.xlu0 %v275, 32
    %v280 = vpop.permute.xlu0 %279
    %281 = vrot.lane.b32.xlu0 %v276, 32
    %v282 = vpop.permute.xlu0 %281
    %v285 = vadd.f32 %v265, %v280
    %v286 = vadd.f32 %v266, %v282
    %v287 = vtanh.pop %v285
    %v288 = vtanh.pop %v286
    %291 = vrot.lane.b32.xlu0 %v287, 64
    %v292 = vpop.permute.xlu0 %291
    %293 = vrot.lane.b32.xlu0 %v288, 64
    %v294 = vpop.permute.xlu0 %293
    %v297 = vmul.f32 %v252, %v292
    %v298 = vmul.f32 %v254, %v294
    %s299 = scalar_lea.vmem %s1, 16
    %v300 = vld [vmem:[%s299] sm:$0xff]
    %v301 = vld [vmem:[%s299 + $0x8] sm:$0xff]
    %s302 = scalar_lea.vmem %s2, 16
    %v303 = vld [vmem:[%s302] sm:$0xff]
    %v304 = vld [vmem:[%s302 + $0x8] sm:$0xff]
    %307 = vrot.lane.b32.xlu0 %v297, 32
    %v308 = vpop.permute.xlu0 %307
    %309 = vrot.lane.b32.xlu0 %v298, 32
    %v310 = vpop.permute.xlu0 %309
    %315 = vrot.lane.b32.xlu0 %v300, 32
    %v316 = vpop.permute.xlu0 %315
    %317 = vrot.lane.b32.xlu0 %v301, 32
    %v318 = vpop.permute.xlu0 %317
    %vm321 = vcmask 261120
    %v322 = vsel %vm321, %v308, %v316
    %v323 = vsel %vm321, %v310, %v318
    %v324 = vld [vmem:[%s5] sm:$0xff]
    %v325 = vld [vmem:[%s5 + $0x8] sm:$0xff]
    %v326 = vld [vmem:[%s5 + $0x10] sm:$0xff]
    %v327 = vld [vmem:[%s5 + $0x18] sm:$0xff]
    %v328 = vld [vmem:[%s5 + $0x20] sm:$0xff]
    %v329 = vld [vmem:[%s5 + $0x28] sm:$0xff]
    %v330 = vld [vmem:[%s5 + $0x30] sm:$0xff]
    %v331 = vld [vmem:[%s5 + $0x38] sm:$0xff]
    %v332 = vld [vmem:[%s6] sm:$0x1]
    %v334 = vlaneseq
    %v335 = vshrl.u32 %v334, 7
    %v336 = vsub.s32 0, %v335
    %v337 = vrot.slane %v332, %v336
    %vm339 = vcmask 523264
    %v341 = vsel %vm339, %v322, 0
    %v344 = vsel %vm339, %v323, 0
    %346 = vmatprep.subr.mxu0 0.0
    %347 = vmatpush1.msra.mxu0 0.0
    %348 = vmatprep.subr.mxu0 0.0
    %349 = vmatpush1.msra.mxu0 0.0
    %350 = vmatprep.subr.mxu0 0.0
    %351 = vmatpush1.msra.mxu0 0.0
    %352 = vmatprep.subr.mxu0 0.0
    %353 = vmatpush1.msra.mxu0 0.0
    %354 = vmatprep.subr.mxu0 0.0
    %355 = vmatpush1.msra.mxu0 0.0
    %356 = vmatprep.subr.mxu0 0.0
    %357 = vmatpush1.msra.mxu0 0.0
    %358 = vmatprep.subr.mxu0 0.0
    %359 = vmatpush1.msra.mxu0 0.0
    %360 = vmatprep.subr.mxu0 0.0
    %361 = vmatpush1.msra.mxu0 0.0
    %362 = vmatprep.subr.mxu0 0.0
    %363 = vmatpush1.msra.mxu0 %v331
    %364 = vmatprep.subr.mxu0 0.0
    %365 = vmatpush1.msra.mxu0 %v330
    %366 = vmatprep.subr.mxu0 0.0
    %367 = vmatpush1.msra.mxu0 %v329
    %368 = vmatprep.subr.mxu0 0.0
    %369 = vmatpush1.msra.mxu0 %v328
    %370 = vmatprep.subr.mxu0 0.0
    %371 = vmatpush1.msra.mxu0 %v327
    %372 = vmatprep.subr.mxu0 0.0
    %373 = vmatpush1.msra.mxu0 %v326
    %374 = vmatprep.subr.mxu0 0.0
    %375 = vmatpush1.msra.mxu0 %v325
    %376 = vmatprep.subr.mxu0 0.0
    %377 = vmatpush1.msra.mxu0 %v324
    %378 = vmatprep.subr.mxu0 0.0
    %379 = vmatpush2.msra.mxu0 0.0
    %380 = vmatprep.subr.mxu0 0.0
    %381 = vmatpush2.msra.mxu0 0.0
    %382 = vmatprep.subr.mxu0 0.0
    %383 = vmatpush2.msra.mxu0 0.0
    %384 = vmatprep.subr.mxu0 0.0
    %385 = vmatpush2.msra.mxu0 0.0
    %386 = vmatprep.subr.mxu0 0.0
    %387 = vmatpush2.msra.mxu0 0.0
    %388 = vmatprep.subr.mxu0 0.0
    %389 = vmatpush2.msra.mxu0 0.0
    %390 = vmatprep.subr.mxu0 0.0
    %391 = vmatpush2.msra.mxu0 0.0
    %392 = vmatprep.subr.mxu0 0.0
    %393 = vmatpush2.msra.mxu0 0.0
    %394 = vmatprep.subr.mxu0 0.0
    %395 = vmatpush2.msra.mxu0 0.0
    %396 = vmatprep.subr.mxu0 0.0
    %397 = vmatpush2.msra.mxu0 0.0
    %398 = vmatprep.subr.mxu0 0.0
    %399 = vmatpush2.msra.mxu0 0.0
    %400 = vmatprep.subr.mxu0 0.0
    %401 = vmatpush2.msra.mxu0 0.0
    %402 = vmatprep.subr.mxu0 0.0
    %403 = vmatpush2.msra.mxu0 0.0
    %404 = vmatprep.subr.mxu0 0.0
    %405 = vmatpush2.msra.mxu0 0.0
    %406 = vmatprep.subr.mxu0 0.0
    %407 = vmatpush2.msra.mxu0 0.0
    %408 = vmatprep.subr.mxu0 0.0
    %409 = vmatpush2.msra.mxu0 0.0
    %410 = vmatprep.mubr.f32.mxu0 0.0
    %411 = vmatmul.mubr.f32.gmra.mxu0 %v341
    %v412 = vpop.f32.mrf.mxu0
    %v413 = vadd.f32 %v337, %v412
    %v414 = vpop.f32.mrf.mxu0
    %415 = vmatprep.mubr.f32.mxu0 0.0
    %416 = vmatmul.mubr.f32.gmra.mxu0 %v344
    %v417 = vpop.f32.mrf.mxu0
    %v418 = vadd.f32 %v337, %v417
    %v419 = vpop.f32.mrf.mxu0
    %420 = vdwg.mxu0
    %v421 = vxor.u32 %v413, 2147483648
    %v422 = vxor.u32 %v418, 2147483648
    %v423 = vmul.f32 %v421, 1.442695
    %v424 = vpow.pop %v423
    %v425 = vmul.f32 %v422, 1.442695
    %v426 = vpow.pop %v425
    %v427 = vadd.f32 %v424, 1.0
    %v428 = vadd.f32 %v426, 1.0
    %v429 = vrcp.pop %v427
    %v430 = vmul.f32 1.0, %v429
    %v431 = vrcp.pop %v428
    %v432 = vmul.f32 1.0, %v431
    %v433 = vtanh.pop %v413
    %v434 = vtanh.pop %v418
    %437 = vrot.lane.b32.xlu0 %v303, 32
    %v438 = vpop.permute.xlu0 %437
    %439 = vrot.lane.b32.xlu0 %v304, 32
    %v440 = vpop.permute.xlu0 %439
    %v443 = vmul.f32 %v430, %v438
    %v444 = vmul.f32 %v432, %v440
    %447 = vrot.lane.b32.xlu0 %v433, 64
    %v448 = vpop.permute.xlu0 %447
    %449 = vrot.lane.b32.xlu0 %v434, 64
    %v450 = vpop.permute.xlu0 %449
    %v453 = vmul.f32 %v430, %v448
    %v454 = vmul.f32 %v432, %v450
    %457 = vrot.lane.b32.xlu0 %v453, 32
    %v458 = vpop.permute.xlu0 %457
    %459 = vrot.lane.b32.xlu0 %v454, 32
    %v460 = vpop.permute.xlu0 %459
    %v463 = vadd.f32 %v443, %v458
    %v464 = vadd.f32 %v444, %v460
    %v465 = vtanh.pop %v463
    %v466 = vtanh.pop %v464
    %469 = vrot.lane.b32.xlu0 %v465, 64
    %v470 = vpop.permute.xlu0 %469
    %471 = vrot.lane.b32.xlu0 %v466, 64
    %v472 = vpop.permute.xlu0 %471
    %v475 = vmul.f32 %v430, %v470
    %v476 = vmul.f32 %v432, %v472
    %v477 = vld [vmem:[%s7] sm:$0xff]
    %v478 = vld [vmem:[%s7 + $0x8] sm:$0xff]
    %v479 = vld [vmem:[%s7 + $0x10] sm:$0xff]
    %v480 = vld [vmem:[%s7 + $0x18] sm:$0xff]
    %v481 = vld [vmem:[#allocation4] sm:$0x1]
    %v483 = vlaneseq
    %v484 = vshrl.u32 %v483, 7
    %v485 = vsub.s32 0, %v484
    %v486 = vrot.slane %v481, %v485
    %490 = vrot.lane.b32.xlu0 %v475, 32
    %v491 = vpop.permute.xlu0 %490
    %492 = vrot.lane.b32.xlu0 %v476, 32
    %v493 = vpop.permute.xlu0 %492
    %v494 = vsel %vm321, %v491, 0
    %v496 = vsel %vm321, %v493, 0
    %498 = vmatprep.subr.mxu0 0.0
    %499 = vmatpush1.msra.mxu0 0.0
    %500 = vmatprep.subr.mxu0 0.0
    %501 = vmatpush1.msra.mxu0 0.0
    %502 = vmatprep.subr.mxu0 0.0
    %503 = vmatpush1.msra.mxu0 0.0
    %504 = vmatprep.subr.mxu0 0.0
    %505 = vmatpush1.msra.mxu0 0.0
    %506 = vmatprep.subr.mxu0 0.0
    %507 = vmatpush1.msra.mxu0 0.0
    %508 = vmatprep.subr.mxu0 0.0
    %509 = vmatpush1.msra.mxu0 0.0
    %510 = vmatprep.subr.mxu0 0.0
    %511 = vmatpush1.msra.mxu0 0.0
    %512 = vmatprep.subr.mxu0 0.0
    %513 = vmatpush1.msra.mxu0 0.0
    %514 = vmatprep.subr.mxu0 0.0
    %515 = vmatpush1.msra.mxu0 0.0
    %516 = vmatprep.subr.mxu0 0.0
    %517 = vmatpush1.msra.mxu0 0.0
    %518 = vmatprep.subr.mxu0 0.0
    %519 = vmatpush1.msra.mxu0 0.0
    %520 = vmatprep.subr.mxu0 0.0
    %521 = vmatpush1.msra.mxu0 0.0
    %522 = vmatprep.subr.mxu0 0.0
    %523 = vmatpush1.msra.mxu0 %v480
    %524 = vmatprep.subr.mxu0 0.0
    %525 = vmatpush1.msra.mxu0 %v479
    %526 = vmatprep.subr.mxu0 0.0
    %527 = vmatpush1.msra.mxu0 %v478
    %528 = vmatprep.subr.mxu0 0.0
    %529 = vmatpush1.msra.mxu0 %v477
    %530 = vmatprep.subr.mxu0 0.0
    %531 = vmatpush2.msra.mxu0 0.0
    %532 = vmatprep.subr.mxu0 0.0
    %533 = vmatpush2.msra.mxu0 0.0
    %534 = vmatprep.subr.mxu0 0.0
    %535 = vmatpush2.msra.mxu0 0.0
    %536 = vmatprep.subr.mxu0 0.0
    %537 = vmatpush2.msra.mxu0 0.0
    %538 = vmatprep.subr.mxu0 0.0
    %539 = vmatpush2.msra.mxu0 0.0
    %540 = vmatprep.subr.mxu0 0.0
    %541 = vmatpush2.msra.mxu0 0.0
    %542 = vmatprep.subr.mxu0 0.0
    %543 = vmatpush2.msra.mxu0 0.0
    %544 = vmatprep.subr.mxu0 0.0
    %545 = vmatpush2.msra.mxu0 0.0
    %546 = vmatprep.subr.mxu0 0.0
    %547 = vmatpush2.msra.mxu0 0.0
    %548 = vmatprep.subr.mxu0 0.0
    %549 = vmatpush2.msra.mxu0 0.0
    %550 = vmatprep.subr.mxu0 0.0
    %551 = vmatpush2.msra.mxu0 0.0
    %552 = vmatprep.subr.mxu0 0.0
    %553 = vmatpush2.msra.mxu0 0.0
    %554 = vmatprep.subr.mxu0 0.0
    %555 = vmatpush2.msra.mxu0 0.0
    %556 = vmatprep.subr.mxu0 0.0
    %557 = vmatpush2.msra.mxu0 0.0
    %558 = vmatprep.subr.mxu0 0.0
    %559 = vmatpush2.msra.mxu0 0.0
    %560 = vmatprep.subr.mxu0 0.0
    %561 = vmatpush2.msra.mxu0 0.0
    %562 = vmatprep.mubr.f32.mxu0 0.0
    %563 = vmatmul.mubr.f32.gmra.mxu0 %v494
    %v564 = vpop.f32.mrf.mxu0
    %v565 = vadd.f32 %v486, %v564
    %v566 = vpop.f32.mrf.mxu0
    %567 = vmatprep.mubr.f32.mxu0 0.0
    %568 = vmatmul.mubr.f32.gmra.mxu0 %v496
    %v569 = vpop.f32.mrf.mxu0
    %v570 = vadd.f32 %v486, %v569
    %v571 = vpop.f32.mrf.mxu0
    %572 = vdwg.mxu0
    %573 = vst.msk [vmem:[%s17] sm:$0xff] %vm321, %v565
    %574 = vst.msk [vmem:[%s17 + $0x8] sm:$0xff] %vm321, %v570
    %v575 = vld [vmem:[%s9] sm:$0xff]
    %v576 = vld [vmem:[%s9 + $0x8] sm:$0xff]
    %v577 = vld [vmem:[%s9 + $0x10] sm:$0xff]
    %v578 = vld [vmem:[%s9 + $0x18] sm:$0xff]
    %v579 = vld [vmem:[%s9 + $0x20] sm:$0xff]
    %v580 = vld [vmem:[%s9 + $0x28] sm:$0xff]
    %v581 = vld [vmem:[%s9 + $0x30] sm:$0xff]
    %v582 = vld [vmem:[%s9 + $0x38] sm:$0xff]
    %v583 = vld [vmem:[%s9 + $0x40] sm:$0xff]
    %v584 = vld [vmem:[%s9 + $0x48] sm:$0xff]
    %v585 = vld [vmem:[%s9 + $0x50] sm:$0xff]
    %v586 = vld [vmem:[%s9 + $0x58] sm:$0xff]
    %v587 = vld [vmem:[%s9 + $0x60] sm:$0xff]
    %v588 = vld [vmem:[%s9 + $0x68] sm:$0xff]
    %v589 = vld [vmem:[%s9 + $0x70] sm:$0xff]
    %v590 = vld [vmem:[%s9 + $0x78] sm:$0xff]
    %v591 = vld [vmem:[#allocation6] sm:$0xf]
    %v593 = vlaneseq
    %v594 = vshrl.u32 %v593, 7
    %v595 = vsub.s32 0, %v594
    %v596 = vrot.slane %v591, %v595
    %v597 = vlaneseq
    %v598 = vshrl.u32 %v597, 7
    %v599 = vsub.s32 1, %v598
    %v600 = vrot.slane %v591, %v599
    %v601 = vlaneseq
    %v602 = vshrl.u32 %v601, 7
    %v603 = vsub.s32 2, %v602
    %v604 = vrot.slane %v591, %v603
    %v605 = vlaneseq
    %v606 = vshrl.u32 %v605, 7
    %v607 = vsub.s32 3, %v606
    %v608 = vrot.slane %v591, %v607
    %v614 = vsel %vm321, %v565, 0
    %v617 = vsel %vm321, %v570, 0
    %619 = vmatprep.subr.mxu0 0.0
    %620 = vmatpush1.msra.mxu0 0.0
    %621 = vmatprep.subr.mxu0 0.0
    %622 = vmatpush1.msra.mxu0 0.0
    %623 = vmatprep.subr.mxu0 0.0
    %624 = vmatpush1.msra.mxu0 0.0
    %625 = vmatprep.subr.mxu0 0.0
    %626 = vmatpush1.msra.mxu0 0.0
    %627 = vmatprep.subr.mxu0 0.0
    %628 = vmatpush1.msra.mxu0 0.0
    %629 = vmatprep.subr.mxu0 0.0
    %630 = vmatpush1.msra.mxu0 0.0
    %631 = vmatprep.subr.mxu0 0.0
    %632 = vmatpush1.msra.mxu0 0.0
    %633 = vmatprep.subr.mxu0 0.0
    %634 = vmatpush1.msra.mxu0 0.0
    %635 = vmatprep.subr.mxu0 0.0
    %636 = vmatpush1.msra.mxu0 0.0
    %637 = vmatprep.subr.mxu0 0.0
    %638 = vmatpush1.msra.mxu0 0.0
    %639 = vmatprep.subr.mxu0 0.0
    %640 = vmatpush1.msra.mxu0 0.0
    %641 = vmatprep.subr.mxu0 0.0
    %642 = vmatpush1.msra.mxu0 0.0
    %643 = vmatprep.subr.mxu0 %v588
    %644 = vmatpush1.msra.mxu0 %v587
    %645 = vmatprep.subr.mxu0 %v584
    %646 = vmatpush1.msra.mxu0 %v583
    %647 = vmatprep.subr.mxu0 %v580
    %648 = vmatpush1.msra.mxu0 %v579
    %649 = vmatprep.subr.mxu0 %v576
    %650 = vmatpush1.msra.mxu0 %v575
    %651 = vmatprep.subr.mxu0 0.0
    %652 = vmatpush2.msra.mxu0 0.0
    %653 = vmatprep.subr.mxu0 0.0
    %654 = vmatpush2.msra.mxu0 0.0
    %655 = vmatprep.subr.mxu0 0.0
    %656 = vmatpush2.msra.mxu0 0.0
    %657 = vmatprep.subr.mxu0 0.0
    %658 = vmatpush2.msra.mxu0 0.0
    %659 = vmatprep.subr.mxu0 0.0
    %660 = vmatpush2.msra.mxu0 0.0
    %661 = vmatprep.subr.mxu0 0.0
    %662 = vmatpush2.msra.mxu0 0.0
    %663 = vmatprep.subr.mxu0 0.0
    %664 = vmatpush2.msra.mxu0 0.0
    %665 = vmatprep.subr.mxu0 0.0
    %666 = vmatpush2.msra.mxu0 0.0
    %667 = vmatprep.subr.mxu0 0.0
    %668 = vmatpush2.msra.mxu0 0.0
    %669 = vmatprep.subr.mxu0 0.0
    %670 = vmatpush2.msra.mxu0 0.0
    %671 = vmatprep.subr.mxu0 0.0
    %672 = vmatpush2.msra.mxu0 0.0
    %673 = vmatprep.subr.mxu0 0.0
    %674 = vmatpush2.msra.mxu0 0.0
    %675 = vmatprep.subr.mxu0 0.0
    %676 = vmatpush2.msra.mxu0 0.0
    %677 = vmatprep.subr.mxu0 0.0
    %678 = vmatpush2.msra.mxu0 0.0
    %679 = vmatprep.subr.mxu0 0.0
    %680 = vmatpush2.msra.mxu0 0.0
    %681 = vmatprep.subr.mxu0 0.0
    %682 = vmatpush2.msra.mxu0 0.0
    %683 = vmatprep.mubr.f32.mxu0 0.0
    %684 = vmatmul.mubr.f32.gmra.mxu0 %v614
    %v685 = vpop.f32.mrf.mxu0
    %v686 = vadd.f32 %v596, %v685
    %v687 = vpop.f32.mrf.mxu0
    %v688 = vadd.f32 %v600, %v687
    %689 = vmatprep.mubr.f32.mxu0 0.0
    %690 = vmatmul.mubr.f32.gmra.mxu0 %v617
    %v691 = vpop.f32.mrf.mxu0
    %v692 = vadd.f32 %v596, %v691
    %v693 = vpop.f32.mrf.mxu0
    %v694 = vadd.f32 %v600, %v693
    %695 = vdwg.mxu0
    %696 = vmatprep.subr.mxu0 0.0
    %697 = vmatpush1.msra.mxu0 0.0
    %698 = vmatprep.subr.mxu0 0.0
    %699 = vmatpush1.msra.mxu0 0.0
    %700 = vmatprep.subr.mxu0 0.0
    %701 = vmatpush1.msra.mxu0 0.0
    %702 = vmatprep.subr.mxu0 0.0
    %703 = vmatpush1.msra.mxu0 0.0
    %704 = vmatprep.subr.mxu0 0.0
    %705 = vmatpush1.msra.mxu0 0.0
    %706 = vmatprep.subr.mxu0 0.0
    %707 = vmatpush1.msra.mxu0 0.0
    %708 = vmatprep.subr.mxu0 0.0
    %709 = vmatpush1.msra.mxu0 0.0
    %710 = vmatprep.subr.mxu0 0.0
    %711 = vmatpush1.msra.mxu0 0.0
    %712 = vmatprep.subr.mxu0 0.0
    %713 = vmatpush1.msra.mxu0 0.0
    %714 = vmatprep.subr.mxu0 0.0
    %715 = vmatpush1.msra.mxu0 0.0
    %716 = vmatprep.subr.mxu0 0.0
    %717 = vmatpush1.msra.mxu0 0.0
    %718 = vmatprep.subr.mxu0 0.0
    %719 = vmatpush1.msra.mxu0 0.0
    %720 = vmatprep.subr.mxu0 %v590
    %721 = vmatpush1.msra.mxu0 %v589
    %722 = vmatprep.subr.mxu0 %v586
    %723 = vmatpush1.msra.mxu0 %v585
    %724 = vmatprep.subr.mxu0 %v582
    %725 = vmatpush1.msra.mxu0 %v581
    %726 = vmatprep.subr.mxu0 %v578
    %727 = vmatpush1.msra.mxu0 %v577
    %728 = vmatprep.subr.mxu0 0.0
    %729 = vmatpush2.msra.mxu0 0.0
    %730 = vmatprep.subr.mxu0 0.0
    %731 = vmatpush2.msra.mxu0 0.0
    %732 = vmatprep.subr.mxu0 0.0
    %733 = vmatpush2.msra.mxu0 0.0
    %734 = vmatprep.subr.mxu0 0.0
    %735 = vmatpush2.msra.mxu0 0.0
    %736 = vmatprep.subr.mxu0 0.0
    %737 = vmatpush2.msra.mxu0 0.0
    %738 = vmatprep.subr.mxu0 0.0
    %739 = vmatpush2.msra.mxu0 0.0
    %740 = vmatprep.subr.mxu0 0.0
    %741 = vmatpush2.msra.mxu0 0.0
    %742 = vmatprep.subr.mxu0 0.0
    %743 = vmatpush2.msra.mxu0 0.0
    %744 = vmatprep.subr.mxu0 0.0
    %745 = vmatpush2.msra.mxu0 0.0
    %746 = vmatprep.subr.mxu0 0.0
    %747 = vmatpush2.msra.mxu0 0.0
    %748 = vmatprep.subr.mxu0 0.0
    %749 = vmatpush2.msra.mxu0 0.0
    %750 = vmatprep.subr.mxu0 0.0
    %751 = vmatpush2.msra.mxu0 0.0
    %752 = vmatprep.subr.mxu0 0.0
    %753 = vmatpush2.msra.mxu0 0.0
    %754 = vmatprep.subr.mxu0 0.0
    %755 = vmatpush2.msra.mxu0 0.0
    %756 = vmatprep.subr.mxu0 0.0
    %757 = vmatpush2.msra.mxu0 0.0
    %758 = vmatprep.subr.mxu0 0.0
    %759 = vmatpush2.msra.mxu0 0.0
    %760 = vmatprep.mubr.f32.mxu0 0.0
    %761 = vmatmul.mubr.f32.gmra.mxu0 %v614
    %v762 = vpop.f32.mrf.mxu0
    %v763 = vadd.f32 %v604, %v762
    %v764 = vpop.f32.mrf.mxu0
    %v765 = vadd.f32 %v608, %v764
    %766 = vmatprep.mubr.f32.mxu0 0.0
    %767 = vmatmul.mubr.f32.gmra.mxu0 %v617
    %v768 = vpop.f32.mrf.mxu0
    %v769 = vadd.f32 %v604, %v768
    %v770 = vpop.f32.mrf.mxu0
    %v771 = vadd.f32 %v608, %v770
    %772 = vdwg.mxu0
    %v773 = vld [vmem:[#allocation7] sm:$0xf]
    %v774 = vld [vmem:[#allocation9] sm:$0xf]
    %v775 = vld [vmem:[%s13] sm:$0xff]
    %v776 = vld [vmem:[%s13 + $0x8] sm:$0xff]
    %v777 = vld [vmem:[%s13 + $0x10] sm:$0xff]
    %v778 = vld [vmem:[%s13 + $0x18] sm:$0xff]
    %v779 = vld [vmem:[%s13 + $0x20] sm:$0xff]
    %v780 = vld [vmem:[%s13 + $0x28] sm:$0xff]
    %v781 = vld [vmem:[%s13 + $0x30] sm:$0xff]
    %v782 = vld [vmem:[%s13 + $0x38] sm:$0xff]
    %v783 = vld [vmem:[%s13 + $0x40] sm:$0xff]
    %v784 = vld [vmem:[%s13 + $0x48] sm:$0xff]
    %v785 = vld [vmem:[%s13 + $0x50] sm:$0xff]
    %v786 = vld [vmem:[%s13 + $0x58] sm:$0xff]
    %v787 = vld [vmem:[%s13 + $0x60] sm:$0xff]
    %v788 = vld [vmem:[%s13 + $0x68] sm:$0xff]
    %v789 = vld [vmem:[%s13 + $0x70] sm:$0xff]
    %v790 = vld [vmem:[%s13 + $0x78] sm:$0xff]
    %v791 = vld [vmem:[%s13 + $0x80] sm:$0xff]
    %v792 = vld [vmem:[%s13 + $0x88] sm:$0xff]
    %v793 = vld [vmem:[%s13 + $0x90] sm:$0xff]
    %v794 = vld [vmem:[%s13 + $0x98] sm:$0xff]
    %v795 = vld [vmem:[%s13 + $0xa0] sm:$0xff]
    %v796 = vld [vmem:[%s13 + $0xa8] sm:$0xff]
    %v797 = vld [vmem:[%s13 + $0xb0] sm:$0xff]
    %v798 = vld [vmem:[%s13 + $0xb8] sm:$0xff]
    %v799 = vld [vmem:[%s13 + $0xc0] sm:$0xff]
    %v800 = vld [vmem:[%s13 + $0xc8] sm:$0xff]
    %v801 = vld [vmem:[%s13 + $0xd0] sm:$0xff]
    %v802 = vld [vmem:[%s13 + $0xd8] sm:$0xff]
    %v803 = vld [vmem:[%s13 + $0xe0] sm:$0xff]
    %v804 = vld [vmem:[%s13 + $0xe8] sm:$0xff]
    %v805 = vld [vmem:[%s13 + $0xf0] sm:$0xff]
    %v806 = vld [vmem:[%s13 + $0xf8] sm:$0xff]
    %v807 = vld [vmem:[#allocation10] sm:$0x1]
    %v808 = vld [vmem:[%s15] sm:$0xff]
    %v809 = vld [vmem:[%s15 + $0x8] sm:$0xff]
    %v810 = vld [vmem:[%s15 + $0x10] sm:$0xff]
    %v811 = vld [vmem:[%s15 + $0x18] sm:$0xff]
    %v812 = vld [vmem:[%s15 + $0x20] sm:$0xff]
    %v813 = vld [vmem:[%s15 + $0x28] sm:$0xff]
    %v814 = vld [vmem:[%s15 + $0x30] sm:$0xff]
    %v815 = vld [vmem:[%s15 + $0x38] sm:$0xff]
    %v816 = vld [vmem:[%s15 + $0x40] sm:$0xff]
    %v817 = vld [vmem:[%s15 + $0x48] sm:$0xff]
    %v818 = vld [vmem:[%s15 + $0x50] sm:$0xff]
    %v819 = vld [vmem:[%s15 + $0x58] sm:$0xff]
    %v820 = vld [vmem:[%s15 + $0x60] sm:$0xff]
    %v821 = vld [vmem:[%s15 + $0x68] sm:$0xff]
    %v822 = vld [vmem:[%s15 + $0x70] sm:$0xff]
    %v823 = vld [vmem:[%s15 + $0x78] sm:$0xff]
    %v824 = vld [vmem:[%s15 + $0x80] sm:$0xff]
    %v825 = vld [vmem:[%s15 + $0x88] sm:$0xff]
    %v826 = vld [vmem:[%s15 + $0x90] sm:$0xff]
    %v827 = vld [vmem:[%s15 + $0x98] sm:$0xff]
    %v828 = vld [vmem:[%s15 + $0xa0] sm:$0xff]
    %v829 = vld [vmem:[%s15 + $0xa8] sm:$0xff]
    %v830 = vld [vmem:[%s15 + $0xb0] sm:$0xff]
    %v831 = vld [vmem:[%s15 + $0xb8] sm:$0xff]
    %v832 = vld [vmem:[%s15 + $0xc0] sm:$0xff]
    %v833 = vld [vmem:[%s15 + $0xc8] sm:$0xff]
    %v834 = vld [vmem:[%s15 + $0xd0] sm:$0xff]
    %v835 = vld [vmem:[%s15 + $0xd8] sm:$0xff]
    %v836 = vld [vmem:[%s15 + $0xe0] sm:$0xff]
    %v837 = vld [vmem:[%s15 + $0xe8] sm:$0xff]
    %v838 = vld [vmem:[%s15 + $0xf0] sm:$0xff]
    %v839 = vld [vmem:[%s15 + $0xf8] sm:$0xff]
    %v840 = vld [vmem:[%s16] sm:$0x1]
    %v841 = vrot.slane %v686, 4
    %v842 = vadd.f32 %v686, %v841
    %v843 = vrot.slane %v842, 2
    %v844 = vadd.f32 %v842, %v843
    %v845 = vrot.slane %v844, 1
    %v846 = vadd.f32 %v844, %v845
    %v847 = vrot.slane %v688, 4
    %v848 = vadd.f32 %v688, %v847
    %v849 = vrot.slane %v848, 2
    %v850 = vadd.f32 %v848, %v849
    %v851 = vrot.slane %v850, 1
    %v852 = vadd.f32 %v850, %v851
    %v853 = vrot.slane %v763, 4
    %v854 = vadd.f32 %v763, %v853
    %v855 = vrot.slane %v854, 2
    %v856 = vadd.f32 %v854, %v855
    %v857 = vrot.slane %v856, 1
    %v858 = vadd.f32 %v856, %v857
    %v859 = vrot.slane %v765, 4
    %v860 = vadd.f32 %v765, %v859
    %v861 = vrot.slane %v860, 2
    %v862 = vadd.f32 %v860, %v861
    %v863 = vrot.slane %v862, 1
    %v864 = vadd.f32 %v862, %v863
    %v865 = vrot.slane %v692, 4
    %v866 = vadd.f32 %v692, %v865
    %v867 = vrot.slane %v866, 2
    %v868 = vadd.f32 %v866, %v867
    %v869 = vrot.slane %v868, 1
    %v870 = vadd.f32 %v868, %v869
    %v871 = vrot.slane %v694, 4
    %v872 = vadd.f32 %v694, %v871
    %v873 = vrot.slane %v872, 2
    %v874 = vadd.f32 %v872, %v873
    %v875 = vrot.slane %v874, 1
    %v876 = vadd.f32 %v874, %v875
    %v877 = vrot.slane %v769, 4
    %v878 = vadd.f32 %v769, %v877
    %v879 = vrot.slane %v878, 2
    %v880 = vadd.f32 %v878, %v879
    %v881 = vrot.slane %v880, 1
    %v882 = vadd.f32 %v880, %v881
    %v883 = vrot.slane %v771, 4
    %v884 = vadd.f32 %v771, %v883
    %v885 = vrot.slane %v884, 2
    %v886 = vadd.f32 %v884, %v885
    %v887 = vrot.slane %v886, 1
    %v888 = vadd.f32 %v886, %v887
    %v889 = vrcp.pop 8.0
    %v890 = vmul.f32 %v846, %v889
    %v891 = vmul.f32 %v852, %v889
    %v892 = vmul.f32 %v858, %v889
    %v893 = vmul.f32 %v864, %v889
    %v894 = vmul.f32 %v870, %v889
    %v895 = vmul.f32 %v876, %v889
    %v896 = vmul.f32 %v882, %v889
    %v897 = vmul.f32 %v888, %v889
    %v898 = vsub.f32 %v686, %v890
    %v899 = vsub.f32 %v688, %v891
    %v900 = vsub.f32 %v763, %v892
    %v901 = vsub.f32 %v765, %v893
    %v902 = vsub.f32 %v692, %v894
    %v903 = vsub.f32 %v694, %v895
    %v904 = vsub.f32 %v769, %v896
    %v905 = vsub.f32 %v771, %v897
    %v906 = vmul.f32 %v898, %v898
    %v907 = vmul.f32 %v899, %v899
    %v908 = vmul.f32 %v900, %v900
    %v909 = vmul.f32 %v901, %v901
    %v910 = vmul.f32 %v902, %v902
    %v911 = vmul.f32 %v903, %v903
    %v912 = vmul.f32 %v904, %v904
    %v913 = vmul.f32 %v905, %v905
    %v914 = vrot.slane %v906, 4
    %v915 = vadd.f32 %v906, %v914
    %v916 = vrot.slane %v915, 2
    %v917 = vadd.f32 %v915, %v916
    %v918 = vrot.slane %v917, 1
    %v919 = vadd.f32 %v917, %v918
    %v920 = vrot.slane %v907, 4
    %v921 = vadd.f32 %v907, %v920
    %v922 = vrot.slane %v921, 2
    %v923 = vadd.f32 %v921, %v922
    %v924 = vrot.slane %v923, 1
    %v925 = vadd.f32 %v923, %v924
    %v926 = vrot.slane %v908, 4
    %v927 = vadd.f32 %v908, %v926
    %v928 = vrot.slane %v927, 2
    %v929 = vadd.f32 %v927, %v928
    %v930 = vrot.slane %v929, 1
    %v931 = vadd.f32 %v929, %v930
    %v932 = vrot.slane %v909, 4
    %v933 = vadd.f32 %v909, %v932
    %v934 = vrot.slane %v933, 2
    %v935 = vadd.f32 %v933, %v934
    %v936 = vrot.slane %v935, 1
    %v937 = vadd.f32 %v935, %v936
    %v938 = vrot.slane %v910, 4
    %v939 = vadd.f32 %v910, %v938
    %v940 = vrot.slane %v939, 2
    %v941 = vadd.f32 %v939, %v940
    %v942 = vrot.slane %v941, 1
    %v943 = vadd.f32 %v941, %v942
    %v944 = vrot.slane %v911, 4
    %v945 = vadd.f32 %v911, %v944
    %v946 = vrot.slane %v945, 2
    %v947 = vadd.f32 %v945, %v946
    %v948 = vrot.slane %v947, 1
    %v949 = vadd.f32 %v947, %v948
    %v950 = vrot.slane %v912, 4
    %v951 = vadd.f32 %v912, %v950
    %v952 = vrot.slane %v951, 2
    %v953 = vadd.f32 %v951, %v952
    %v954 = vrot.slane %v953, 1
    %v955 = vadd.f32 %v953, %v954
    %v956 = vrot.slane %v913, 4
    %v957 = vadd.f32 %v913, %v956
    %v958 = vrot.slane %v957, 2
    %v959 = vadd.f32 %v957, %v958
    %v960 = vrot.slane %v959, 1
    %v961 = vadd.f32 %v959, %v960
    %v962 = vmul.f32 %v919, %v889
    %v963 = vmul.f32 %v925, %v889
    %v964 = vmul.f32 %v931, %v889
    %v965 = vmul.f32 %v937, %v889
    %v966 = vmul.f32 %v943, %v889
    %v967 = vmul.f32 %v949, %v889
    %v968 = vmul.f32 %v955, %v889
    %v969 = vmul.f32 %v961, %v889
    %v970 = vadd.f32 %v962, 1e-05
    %v971 = vadd.f32 %v963, 1e-05
    %v972 = vadd.f32 %v964, 1e-05
    %v973 = vadd.f32 %v965, 1e-05
    %v974 = vadd.f32 %v966, 1e-05
    %v975 = vadd.f32 %v967, 1e-05
    %v976 = vadd.f32 %v968, 1e-05
    %v977 = vadd.f32 %v969, 1e-05
    %v978 = vrsqrt.pop %v970
    %v979 = vrsqrt.pop %v971
    %v980 = vrsqrt.pop %v972
    %v981 = vrsqrt.pop %v973
    %v982 = vrsqrt.pop %v974
    %v983 = vrsqrt.pop %v975
    %v984 = vrsqrt.pop %v976
    %v985 = vrsqrt.pop %v977
    %v986 = vmul.f32 %v898, %v978
    %v987 = vmul.f32 %v899, %v979
    %v988 = vmul.f32 %v900, %v980
    %v989 = vmul.f32 %v901, %v981
    %v990 = vmul.f32 %v902, %v982
    %v991 = vmul.f32 %v903, %v983
    %v992 = vmul.f32 %v904, %v984
    %v993 = vmul.f32 %v905, %v985
    %v995 = vlaneseq
    %v996 = vshrl.u32 %v995, 7
    %v997 = vsub.s32 0, %v996
    %v998 = vrot.slane %v773, %v997
    %v999 = vlaneseq
    %v1000 = vshrl.u32 %v999, 7
    %v1001 = vsub.s32 1, %v1000
    %v1002 = vrot.slane %v773, %v1001
    %v1003 = vlaneseq
    %v1004 = vshrl.u32 %v1003, 7
    %v1005 = vsub.s32 2, %v1004
    %v1006 = vrot.slane %v773, %v1005
    %v1007 = vlaneseq
    %v1008 = vshrl.u32 %v1007, 7
    %v1009 = vsub.s32 3, %v1008
    %v1010 = vrot.slane %v773, %v1009
    %v1015 = vmul.f32 %v986, %v998
    %v1016 = vmul.f32 %v987, %v1002
    %v1017 = vmul.f32 %v988, %v1006
    %v1018 = vmul.f32 %v989, %v1010
    %v1019 = vmul.f32 %v990, %v998
    %v1020 = vmul.f32 %v991, %v1002
    %v1021 = vmul.f32 %v992, %v1006
    %v1022 = vmul.f32 %v993, %v1010
    %v1024 = vlaneseq
    %v1025 = vshrl.u32 %v1024, 7
    %v1026 = vsub.s32 0, %v1025
    %v1027 = vrot.slane %v774, %v1026
    %v1028 = vlaneseq
    %v1029 = vshrl.u32 %v1028, 7
    %v1030 = vsub.s32 1, %v1029
    %v1031 = vrot.slane %v774, %v1030
    %v1032 = vlaneseq
    %v1033 = vshrl.u32 %v1032, 7
    %v1034 = vsub.s32 2, %v1033
    %v1035 = vrot.slane %v774, %v1034
    %v1036 = vlaneseq
    %v1037 = vshrl.u32 %v1036, 7
    %v1038 = vsub.s32 3, %v1037
    %v1039 = vrot.slane %v774, %v1038
    %v1044 = vadd.f32 %v1015, %v1027
    %v1045 = vadd.f32 %v1016, %v1031
    %v1046 = vadd.f32 %v1017, %v1035
    %v1047 = vadd.f32 %v1018, %v1039
    %v1048 = vadd.f32 %v1019, %v1027
    %v1049 = vadd.f32 %v1020, %v1031
    %v1050 = vadd.f32 %v1021, %v1035
    %v1051 = vadd.f32 %v1022, %v1039
    %v1052 = vmax.f32 %v1044, 0.0
    %v1053 = vmax.f32 %v1045, 0.0
    %v1054 = vmax.f32 %v1046, 0.0
    %v1055 = vmax.f32 %v1047, 0.0
    %v1056 = vmax.f32 %v1048, 0.0
    %v1057 = vmax.f32 %v1049, 0.0
    %v1058 = vmax.f32 %v1050, 0.0
    %v1059 = vmax.f32 %v1051, 0.0
    %v1061 = vlaneseq
    %v1062 = vshrl.u32 %v1061, 7
    %v1063 = vsub.s32 0, %v1062
    %v1064 = vrot.slane %v807, %v1063
    %1066 = vmatprep.subr.mxu0 0.0
    %1067 = vmatpush1.msra.mxu0 %v790
    %1068 = vmatprep.subr.mxu0 0.0
    %1069 = vmatpush1.msra.mxu0 %v789
    %1070 = vmatprep.subr.mxu0 0.0
    %1071 = vmatpush1.msra.mxu0 %v788
    %1072 = vmatprep.subr.mxu0 0.0
    %1073 = vmatpush1.msra.mxu0 %v787
    %1074 = vmatprep.subr.mxu0 0.0
    %1075 = vmatpush1.msra.mxu0 %v786
    %1076 = vmatprep.subr.mxu0 0.0
    %1077 = vmatpush1.msra.mxu0 %v785
    %1078 = vmatprep.subr.mxu0 0.0
    %1079 = vmatpush1.msra.mxu0 %v784
    %1080 = vmatprep.subr.mxu0 0.0
    %1081 = vmatpush1.msra.mxu0 %v783
    %1082 = vmatprep.subr.mxu0 0.0
    %1083 = vmatpush1.msra.mxu0 %v782
    %1084 = vmatprep.subr.mxu0 0.0
    %1085 = vmatpush1.msra.mxu0 %v781
    %1086 = vmatprep.subr.mxu0 0.0
    %1087 = vmatpush1.msra.mxu0 %v780
    %1088 = vmatprep.subr.mxu0 0.0
    %1089 = vmatpush1.msra.mxu0 %v779
    %1090 = vmatprep.subr.mxu0 0.0
    %1091 = vmatpush1.msra.mxu0 %v778
    %1092 = vmatprep.subr.mxu0 0.0
    %1093 = vmatpush1.msra.mxu0 %v777
    %1094 = vmatprep.subr.mxu0 0.0
    %1095 = vmatpush1.msra.mxu0 %v776
    %1096 = vmatprep.subr.mxu0 0.0
    %1097 = vmatpush1.msra.mxu0 %v775
    %1098 = vmatprep.subr.mxu0 0.0
    %1099 = vmatpush2.msra.mxu0 %v806
    %1100 = vmatprep.subr.mxu0 0.0
    %1101 = vmatpush2.msra.mxu0 %v805
    %1102 = vmatprep.subr.mxu0 0.0
    %1103 = vmatpush2.msra.mxu0 %v804
    %1104 = vmatprep.subr.mxu0 0.0
    %1105 = vmatpush2.msra.mxu0 %v803
    %1106 = vmatprep.subr.mxu0 0.0
    %1107 = vmatpush2.msra.mxu0 %v802
    %1108 = vmatprep.subr.mxu0 0.0
    %1109 = vmatpush2.msra.mxu0 %v801
    %1110 = vmatprep.subr.mxu0 0.0
    %1111 = vmatpush2.msra.mxu0 %v800
    %1112 = vmatprep.subr.mxu0 0.0
    %1113 = vmatpush2.msra.mxu0 %v799
    %1114 = vmatprep.subr.mxu0 0.0
    %1115 = vmatpush2.msra.mxu0 %v798
    %1116 = vmatprep.subr.mxu0 0.0
    %1117 = vmatpush2.msra.mxu0 %v797
    %1118 = vmatprep.subr.mxu0 0.0
    %1119 = vmatpush2.msra.mxu0 %v796
    %1120 = vmatprep.subr.mxu0 0.0
    %1121 = vmatpush2.msra.mxu0 %v795
    %1122 = vmatprep.subr.mxu0 0.0
    %1123 = vmatpush2.msra.mxu0 %v794
    %1124 = vmatprep.subr.mxu0 0.0
    %1125 = vmatpush2.msra.mxu0 %v793
    %1126 = vmatprep.subr.mxu0 0.0
    %1127 = vmatpush2.msra.mxu0 %v792
    %1128 = vmatprep.subr.mxu0 0.0
    %1129 = vmatpush2.msra.mxu0 %v791
    %1130 = vmatprep.mubr.f32.mxu0 %v1053
    %1131 = vmatmul.mubr.f32.gmra.mxu0 %v1052
    %v1132 = vpop.f32.mrf.mxu0
    %v1133 = vadd.f32 %v1064, %v1132
    %v1134 = vpop.f32.mrf.mxu0
    %1135 = vmatprep.mubr.f32.mxu0 %v1057
    %1136 = vmatmul.mubr.f32.gmra.mxu0 %v1056
    %v1137 = vpop.f32.mrf.mxu0
    %v1138 = vadd.f32 %v1064, %v1137
    %v1139 = vpop.f32.mrf.mxu0
    %1140 = vdwg.mxu0
    %v1142 = vlaneseq
    %v1143 = vshrl.u32 %v1142, 7
    %v1144 = vsub.s32 0, %v1143
    %v1145 = vrot.slane %v840, %v1144
    %1147 = vmatprep.subr.mxu0 0.0
    %1148 = vmatpush1.msra.mxu0 %v823
    %1149 = vmatprep.subr.mxu0 0.0
    %1150 = vmatpush1.msra.mxu0 %v822
    %1151 = vmatprep.subr.mxu0 0.0
    %1152 = vmatpush1.msra.mxu0 %v821
    %1153 = vmatprep.subr.mxu0 0.0
    %1154 = vmatpush1.msra.mxu0 %v820
    %1155 = vmatprep.subr.mxu0 0.0
    %1156 = vmatpush1.msra.mxu0 %v819
    %1157 = vmatprep.subr.mxu0 0.0
    %1158 = vmatpush1.msra.mxu0 %v818
    %1159 = vmatprep.subr.mxu0 0.0
    %1160 = vmatpush1.msra.mxu0 %v817
    %1161 = vmatprep.subr.mxu0 0.0
    %1162 = vmatpush1.msra.mxu0 %v816
    %1163 = vmatprep.subr.mxu0 0.0
    %1164 = vmatpush1.msra.mxu0 %v815
    %1165 = vmatprep.subr.mxu0 0.0
    %1166 = vmatpush1.msra.mxu0 %v814
    %1167 = vmatprep.subr.mxu0 0.0
    %1168 = vmatpush1.msra.mxu0 %v813
    %1169 = vmatprep.subr.mxu0 0.0
    %1170 = vmatpush1.msra.mxu0 %v812
    %1171 = vmatprep.subr.mxu0 0.0
    %1172 = vmatpush1.msra.mxu0 %v811
    %1173 = vmatprep.subr.mxu0 0.0
    %1174 = vmatpush1.msra.mxu0 %v810
    %1175 = vmatprep.subr.mxu0 0.0
    %1176 = vmatpush1.msra.mxu0 %v809
    %1177 = vmatprep.subr.mxu0 0.0
    %1178 = vmatpush1.msra.mxu0 %v808
    %1179 = vmatprep.subr.mxu0 0.0
    %1180 = vmatpush2.msra.mxu0 %v839
    %1181 = vmatprep.subr.mxu0 0.0
    %1182 = vmatpush2.msra.mxu0 %v838
    %1183 = vmatprep.subr.mxu0 0.0
    %1184 = vmatpush2.msra.mxu0 %v837
    %1185 = vmatprep.subr.mxu0 0.0
    %1186 = vmatpush2.msra.mxu0 %v836
    %1187 = vmatprep.subr.mxu0 0.0
    %1188 = vmatpush2.msra.mxu0 %v835
    %1189 = vmatprep.subr.mxu0 0.0
    %1190 = vmatpush2.msra.mxu0 %v834
    %1191 = vmatprep.subr.mxu0 0.0
    %1192 = vmatpush2.msra.mxu0 %v833
    %1193 = vmatprep.subr.mxu0 0.0
    %1194 = vmatpush2.msra.mxu0 %v832
    %1195 = vmatprep.subr.mxu0 0.0
    %1196 = vmatpush2.msra.mxu0 %v831
    %1197 = vmatprep.subr.mxu0 0.0
    %1198 = vmatpush2.msra.mxu0 %v830
    %1199 = vmatprep.subr.mxu0 0.0
    %1200 = vmatpush2.msra.mxu0 %v829
    %1201 = vmatprep.subr.mxu0 0.0
    %1202 = vmatpush2.msra.mxu0 %v828
    %1203 = vmatprep.subr.mxu0 0.0
    %1204 = vmatpush2.msra.mxu0 %v827
    %1205 = vmatprep.subr.mxu0 0.0
    %1206 = vmatpush2.msra.mxu0 %v826
    %1207 = vmatprep.subr.mxu0 0.0
    %1208 = vmatpush2.msra.mxu0 %v825
    %1209 = vmatprep.subr.mxu0 0.0
    %1210 = vmatpush2.msra.mxu0 %v824
    %1211 = vmatprep.mubr.f32.mxu0 %v1055
    %1212 = vmatmul.mubr.f32.gmra.mxu0 %v1054
    %v1213 = vpop.f32.mrf.mxu0
    %v1214 = vadd.f32 %v1145, %v1213
    %v1215 = vpop.f32.mrf.mxu0
    %1216 = vmatprep.mubr.f32.mxu0 %v1059
    %1217 = vmatmul.mubr.f32.gmra.mxu0 %v1058
    %v1218 = vpop.f32.mrf.mxu0
    %v1219 = vadd.f32 %v1145, %v1218
    %v1220 = vpop.f32.mrf.mxu0
    %1221 = vdwg.mxu0
    %v1222 = vmul.f32 %v1133, %v1133
    %v1223 = vmul.f32 %v1138, %v1138
    %1224 = vadd.xlane.f32.xlu0 %v1222
    %v1225 = vpop.xlane.xlu0 %1224
    %1226 = vadd.xlane.f32.xlu0 %v1223
    %v1227 = vpop.xlane.xlu0 %1226
    %v1228 = vmax.f32 %v1225, 1e-24
    %v1229 = vmax.f32 %v1227, 1e-24
    %v1230 = vrsqrt.pop %v1228
    %v1231 = vrsqrt.pop %v1229
    %v1232 = vmul.f32 %v1133, %v1230
    %v1233 = vmul.f32 %v1138, %v1231
    %1234 = vst [vmem:[%s18] sm:$0xff] %v1232
    %1235 = vst [vmem:[%s18 + $0x8] sm:$0xff] %v1233
    %vm1236 = vcmask 31744
    %v1237 = vsel %vm1236, %v1214, -inf
    %1238 = vmax.xlane.f32.xlu0 %v1237
    %v1239 = vpop.xlane.xlu0 %1238
    %v1240 = vsel %vm1236, %v1219, -inf
    %1241 = vmax.xlane.f32.xlu0 %v1240
    %v1242 = vpop.xlane.xlu0 %1241
    %v1243 = vsub.f32 %v1214, %v1239
    %v1244 = vsub.f32 %v1219, %v1242
    %v1245 = vmul.f32 %v1243, 1.442695
    %v1246 = vpow.pop %v1245
    %v1247 = vmul.f32 %v1244, 1.442695
    %v1248 = vpow.pop %v1247
    %v1249 = vsel %vm1236, %v1246, 0.0
    %1250 = vadd.xlane.f32.xlu0 %v1249
    %v1251 = vpop.xlane.xlu0 %1250
    %v1252 = vsel %vm1236, %v1248, 0.0
    %1253 = vadd.xlane.f32.xlu0 %v1252
    %v1254 = vpop.xlane.xlu0 %1253
    %v1255 = vrcp.pop %v1251
    %v1256 = vrcp.pop %v1254
    %v1257 = vmul.f32 %v1246, %v1255
    %v1258 = vmul.f32 %v1248, %v1256
    %1259 = vst.msk [vmem:[%s19] sm:$0xff] %vm1236, %v1257
    %1260 = vst.msk [vmem:[%s19 + $0x8] sm:$0xff] %vm1236, %v1258
    // Predicated region
    $region94: #{_lambda_.1} parent=1 // pred_check
      _
    $region95: #{_lambda_.1} parent=1 // pred_check_branch
      %1262 = sbr.rel (0) target = $region97
    $region96: #{_lambda_.1} parent=1 // pred_region
      _
    $region97: #{_lambda_.1} parent=1 // pred_fallthru
      _
    // Predicated region
    $region98: #{_lambda_.1} parent=1 // pred_check
      _
    $region99: #{_lambda_.1} parent=1 // pred_check_branch
      %1264 = sbr.rel (0) target = $region101
    $region100: #{_lambda_.1} parent=1 // pred_region
      _
    $region101: #{_lambda_.1} parent=1 // pred_fallthru
      _
    // Predicated region
    $region102: #{_lambda_.1} parent=1 // pred_check
      _
    $region103: #{_lambda_.1} parent=1 // pred_check_branch
      %1266 = sbr.rel (0) target = $region105
    $region104: #{_lambda_.1} parent=1 // pred_region
      _
    $region105: #{_lambda_.1} parent=1 // pred_fallthru
      _
    // Predicated region
    $region106: #{_lambda_.1} parent=1 // pred_check
      _
    $region107: #{_lambda_.1} parent=1 // pred_check_branch
      %1268 = sbr.rel (0) target = $region109
    $region108: #{_lambda_.1} parent=1 // pred_region
      _
    $region109: #{_lambda_.1} parent=1 // pred_fallthru
      _
    // Predicated region
    $region110: #{_lambda_.1} parent=1 // pred_check
      _
    $region111: #{_lambda_.1} parent=1 // pred_check_branch
      %1270 = sbr.rel (0) target = $region113
    $region112: #{_lambda_.1} parent=1 // pred_region
      _
    $region113: #{_lambda_.1} parent=1 // pred_fallthru
      _
    // Predicated region
    $region114: #{_lambda_.1} parent=1 // pred_check
      _
    $region115: #{_lambda_.1} parent=1 // pred_check_branch
      %1272 = sbr.rel (0) target = $region117
    $region116: #{_lambda_.1} parent=1 // pred_region
      _
    $region117: #{_lambda_.1} parent=1 // pred_fallthru
      _
    %1273 = vsyncpa [#allocation3], 1
    %1274 = vsyncpa [#allocation5], 1
    %1275 = vsyncpa [#allocation8], 1
    %1276 = vsyncpa [#allocation11], 1

</llo_original>
